<compile_context>
chip_gen: v7x
topology: tpu7x:2x2x1
jax: 0.10.0
libtpu: 0.0.40
codegen_flags: <defaults>
</compile_context>

<pallas_src>
import functools
import math

import jax
import jax.numpy as jnp
import numpy as np
from jax.experimental import pallas as pl
from jax.experimental.pallas import tpu as pltpu

INPUT_SIZE = 100
HIDDEN1 = 50
HIDDEN2 = 20
NUM_CLASSES = 1

LANE = 128          # TPU lane width; fan-out dims padded to this
H1_PAD = LANE       # 50  -> 128
H2_PAD = LANE       # 20  -> 128
DEFAULT_TB = 4096   # batch rows per grid step (review: 4096-8192)
VMEM_LIMIT_BYTES = 32 * 1024 * 1024


def _round_up(n, m):
    return ((n + m - 1) // m) * m


def _cdiv(a, b):
    return -(-a // b)


def _bf16_vpu_native():
    """v6e/v7x VPUs are bf16-native; v5e/v4 are not (keep the epilogue in f32 there)."""
    try:
        kind = jax.devices()[0].device_kind.lower()
    except Exception:
        return False
    return any(tag in kind for tag in ("v6", "v7", "tpu7", "trillium", "ironwood"))


def dnn_kernel(x_ref, w1_ref, b1_ref, w2_ref, b2_ref, w3_ref, b3_ref, o_ref, *,
               bf16_epilogue, lane_dense):
    f32, bf16 = jnp.float32, jnp.bfloat16

    x = x_ref[...]
    if x.dtype != bf16:            # accept bf16 x directly (no in-kernel cast then)
        x = x.astype(bf16)

    # fc1 + ReLU.  MXU: bf16 operands, f32 accumulation.  Padded cols (50..127) stay 0.
    h1 = jnp.dot(x, w1_ref[...], preferred_element_type=f32)              # (TB, 128)
    if bf16_epilogue:
        h1 = jnp.maximum(h1.astype(bf16) + b1_ref[...].astype(bf16), 0)
    else:
        h1 = jnp.maximum(h1 + b1_ref[...], 0.0).astype(bf16)

    # fc2 + ReLU.  Padded cols (20..127) stay 0.
    h2 = jnp.dot(h1, w2_ref[...], preferred_element_type=f32)             # (TB, 128)
    if bf16_epilogue:
        h2 = jnp.maximum(h2.astype(bf16) + b2_ref[...].astype(bf16), 0)
        g = (h2 * w3_ref[...].astype(bf16)).astype(f32)
    else:
        h2 = jnp.maximum(h2 + b2_ref[...], 0.0)
        g = h2 * w3_ref[...]

    # fc3 (20 -> 1): lane reduction on the VPU/XLU (f32), scalar bias from SMEM.
    out_col = jnp.sum(g, axis=-1, keepdims=True) + b3_ref[0, 0]           # (TB, 1) f32

    if lane_dense:
        # Move the batch index from sublanes to lanes so the output block is a dense
        # (TB/128, 128) slab: unmasked stores and a dense writeback DMA.
        r, lanes = o_ref.shape[1], o_ref.shape[2]
        o_ref[0] = out_col.reshape(r, lanes).astype(o_ref.dtype)
    else:
        o_ref[...] = out_col.astype(o_ref.dtype)


def _dnn_pallas(x, kernel_params, *, tb, bf16_epilogue, lane_dense):
    w1, b1, w2, b2, w3, b3 = kernel_params
    B = x.shape[0]

    # Batch tile: a multiple of 128 (lane-dense output), capped so large batches give at
    # least 2 grid steps (keeps both v7x TensorCores busy under "parallel").
    tb = _round_up(max(tb, LANE), LANE)
    TB = min(tb, _round_up(_cdiv(B, 2), LANE))
    num_blocks = _cdiv(B, TB)
    grid = (num_blocks,)

    def resident(shape):   # same block every step -> stays VMEM-resident, no re-DMA
        return pl.BlockSpec(shape, lambda i: (0, 0))

    in_specs = [
        pl.BlockSpec((TB, INPUT_SIZE), lambda i: (i, 0)),     # x: batch-tiled, pipelined
        resident((INPUT_SIZE, H1_PAD)),                       # w1 (bf16)
        resident((1, H1_PAD)),                                # b1 (f32)
        resident((H1_PAD, H2_PAD)),                           # w2 (bf16)
        resident((1, H2_PAD)),                                # b2 (f32)
        resident((1, H2_PAD)),                                # w3 row (f32)
        pl.BlockSpec(memory_space=pltpu.MemorySpace.SMEM),    # b3 scalar (1, 1)
    ]

    kernel = functools.partial(dnn_kernel, bf16_epilogue=bf16_epilogue,
                               lane_dense=lane_dense)
    compiler_params = pltpu.CompilerParams(
        dimension_semantics=("parallel",),                    # 2-TC sharding on v7x
        vmem_limit_bytes=VMEM_LIMIT_BYTES,                    # v5e default is only 16 MiB
    )

    if lane_dense:
        r = TB // LANE
        out = pl.pallas_call(
            kernel,
            out_shape=jax.ShapeDtypeStruct((num_blocks, r, LANE), jnp.float32),
            grid=grid,
            in_specs=in_specs,
            out_specs=pl.BlockSpec((1, r, LANE), lambda i: (i, 0, 0)),
            compiler_params=compiler_params,
        )(x, w1, b1, w2, b2, w3, b3)
        # Rows past B (partial last batch tile) are padding; drop them host-side.
        return out.reshape(-1)[:B].reshape(B, NUM_CLASSES)

    out = pl.pallas_call(
        kernel,
        out_shape=jax.ShapeDtypeStruct((B, NUM_CLASSES), jnp.float32),
        grid=grid,
        in_specs=in_specs,
        out_specs=pl.BlockSpec((TB, NUM_CLASSES), lambda i: (i, 0)),
        compiler_params=compiler_params,
    )(x, w1, b1, w2, b2, w3, b3)
    return out


_LANE_DENSE_OK = None


def _zero_kernel_params():
    return (jnp.zeros((INPUT_SIZE, H1_PAD), jnp.bfloat16),
            jnp.zeros((1, H1_PAD), jnp.float32),
            jnp.zeros((H1_PAD, H2_PAD), jnp.bfloat16),
            jnp.zeros((1, H2_PAD), jnp.float32),
            jnp.zeros((1, H2_PAD), jnp.float32),
            jnp.zeros((1, 1), jnp.float32))


def _lane_dense_supported():
    """One-time probe: the lane-dense output path needs the in-kernel
    (TB,1)->(TB/128,128) sublane->lane relayout (a Mosaic reshape).  If the running
    Mosaic build rejects it, fall back to the thin (B,1) output layout (correct,
    slightly slower store path)."""
    global _LANE_DENSE_OK
    if _LANE_DENSE_OK is None:
        try:
            probe = _dnn_pallas(jnp.zeros((LANE, INPUT_SIZE), jnp.float32),
                                _zero_kernel_params(), tb=LANE,
                                bf16_epilogue=False, lane_dense=True)
            jax.block_until_ready(probe)
            _LANE_DENSE_OK = True
        except Exception:
            _LANE_DENSE_OK = False
    return _LANE_DENSE_OK


def dnn_forward(x, kernel_params, *, tb=DEFAULT_TB, bf16_epilogue=None, lane_dense=None):
    if bf16_epilogue is None:
        bf16_epilogue = _bf16_vpu_native()
    if lane_dense is None:
        lane_dense = _lane_dense_supported()
    return _dnn_pallas(x, kernel_params, tb=tb, bf16_epilogue=bf16_epilogue,
                       lane_dense=lane_dense)


def init_params(key):
    """PyTorch nn.Linear-style init; weights kept as (fan_in, fan_out) so y = x @ W + b."""
    def linear(k, fan_in, fan_out):
        kw, kb = jax.random.split(k)
        bound = 1.0 / math.sqrt(fan_in)
        w = jax.random.uniform(kw, (fan_in, fan_out), jnp.float32, -bound, bound)
        b = jax.random.uniform(kb, (fan_out,), jnp.float32, -bound, bound)
        return w, b

    k1, k2, k3 = jax.random.split(key, 3)
    w1, b1 = linear(k1, INPUT_SIZE, HIDDEN1)
    w2, b2 = linear(k2, HIDDEN1, HIDDEN2)
    w3, b3 = linear(k3, HIDDEN2, NUM_CLASSES)
    return w1, b1, w2, b2, w3, b3


def pack_params(params):
    """Pad fan-out dims to 128 lanes (zero padding keeps the math exact: ReLU(0)=0 and
    the padded w3 entries are 0), cast MXU weight operands to bf16, keep biases f32,
    and shape the final scalar bias (1, 1) for SMEM."""
    w1, b1, w2, b2, w3, b3 = params
    w1p = jnp.zeros((INPUT_SIZE, H1_PAD), jnp.float32).at[:, :HIDDEN1].set(w1).astype(jnp.bfloat16)
    b1p = jnp.zeros((1, H1_PAD), jnp.float32).at[0, :HIDDEN1].set(b1)
    w2p = jnp.zeros((H1_PAD, H2_PAD), jnp.float32).at[:HIDDEN1, :HIDDEN2].set(w2).astype(jnp.bfloat16)
    b2p = jnp.zeros((1, H2_PAD), jnp.float32).at[0, :HIDDEN2].set(b2)
    w3p = jnp.zeros((1, H2_PAD), jnp.float32).at[0, :HIDDEN2].set(w3[:, 0])
    b3p = b3.reshape(1, 1).astype(jnp.float32)
    return w1p, b1p, w2p, b2p, w3p, b3p


def reference_forward(x, params):
    """f32 reference that emulates the kernel's bf16 rounding of the MXU operands.
    (bf16 use deviates from strict PyTorch f32 numerics by ~1e-3 relative.)"""
    w1, b1, w2, b2, w3, b3 = params
    bf = lambda a: a.astype(jnp.bfloat16).astype(jnp.float32)
    h1 = jnp.maximum(jnp.dot(bf(x), bf(w1)) + b1, 0.0)
    h2 = jnp.maximum(jnp.dot(bf(h1), bf(w2)) + b2, 0.0)
    return jnp.dot(h2, w3) + b3


if __name__ == "__main__":
    key = jax.random.PRNGKey(0)
    kx1, kx2, kp = jax.random.split(key, 3)

    params = init_params(kp)
    kernel_params = pack_params(params)

    # Case 1: tiny batch, single grid step, f32 x, f32 epilogue (v5e-style path).
    x_small = jax.random.normal(kx1, (8, INPUT_SIZE), jnp.float32)
    out = jax.block_until_ready(dnn_forward(x_small, kernel_params, bf16_epilogue=False))
    ref = reference_forward(x_small, params)
    assert out.shape == (8, NUM_CLASSES)
    np.testing.assert_allclose(np.asarray(out), np.asarray(ref), rtol=2e-3, atol=2e-3)

    # Case 2: multi-step grid (2 tiles, partial last tile), bf16 epilogue (v6e/v7x path).
    x_med = jax.random.normal(kx2, (300, INPUT_SIZE), jnp.float32)
    out = jax.block_until_ready(
        dnn_forward(x_med, kernel_params, tb=256, bf16_epilogue=True))
    ref = reference_forward(x_med, params)
    assert out.shape == (300, NUM_CLASSES)
    np.testing.assert_allclose(np.asarray(out), np.asarray(ref), rtol=5e-2, atol=5e-2)

    # Case 3: bf16 x fed straight to the kernel (no wrapper cast), f32 epilogue.
    out = jax.block_until_ready(
        dnn_forward(x_med.astype(jnp.bfloat16), kernel_params, tb=256, bf16_epilogue=False))
    np.testing.assert_allclose(np.asarray(out), np.asarray(ref), rtol=2e-3, atol=2e-3)

    print("KERNEL_OK")
</pallas_src>

<mosaic_0001>
module attributes {stable_mosaic.version = 11 : i64} {
  func.func @dnn_kernel(%arg0: i32, %arg1: memref<128x100xf32, #tpu.memory_space<vmem>>, %arg2: memref<100x128xbf16, #tpu.memory_space<vmem>>, %arg3: memref<1x128xf32, #tpu.memory_space<vmem>>, %arg4: memref<128x128xbf16, #tpu.memory_space<vmem>>, %arg5: memref<1x128xf32, #tpu.memory_space<vmem>>, %arg6: memref<1x128xf32, #tpu.memory_space<vmem>>, %arg7: memref<1x1xf32, #tpu.memory_space<smem>>, %arg8: memref<1x1x128xf32, #tpu.memory_space<vmem>>) attributes {dimension_semantics = [#tpu.dimension_semantics<parallel>], iteration_bounds = array<i64: 1>, scalar_prefetch = 0 : i64, scratch_operands = 0 : i64, tpu.core_type = #tpu.core_type<tc>, window_params = [{transform_indices = @transform_0, window_bounds = array<i64: 128, 100>}, {pipeline_mode = #tpu.pipeline_mode<synchronous>, transform_indices = @transform_1, window_bounds = array<i64: 100, 128>}, {pipeline_mode = #tpu.pipeline_mode<synchronous>, transform_indices = @transform_2, window_bounds = array<i64: 1, 128>}, {pipeline_mode = #tpu.pipeline_mode<synchronous>, transform_indices = @transform_3, window_bounds = array<i64: 128, 128>}, {pipeline_mode = #tpu.pipeline_mode<synchronous>, transform_indices = @transform_4, window_bounds = array<i64: 1, 128>}, {pipeline_mode = #tpu.pipeline_mode<synchronous>, transform_indices = @transform_5, window_bounds = array<i64: 1, 128>}, {transform_indices = @transform_6, window_bounds = array<i64: 1, 1>}, {transform_indices = @transform_7, window_bounds = array<i64: 1, 1, 128>}]} {
    %c0 = arith.constant 0 : index
    %c0_0 = arith.constant 0 : index
    %0 = vector.load %arg1[%c0, %c0_0] : memref<128x100xf32, #tpu.memory_space<vmem>>, vector<128x100xf32>
    %1 = arith.truncf %0 : vector<128x100xf32> to vector<128x100xbf16>
    %c0_1 = arith.constant 0 : index
    %c0_2 = arith.constant 0 : index
    %2 = vector.load %arg2[%c0_1, %c0_2] : memref<100x128xbf16, #tpu.memory_space<vmem>>, vector<100x128xbf16>
    %cst = arith.constant dense<0.000000e+00> : vector<128x128xf32>
    %3 = tpu.matmul %1, %2, %cst {dimension_numbers = #tpu.dot_dimension_numbers<[1], [0], [0], [1], [0, 0, 1, 1], [], []>} : vector<128x100xbf16>, vector<100x128xbf16>, vector<128x128xf32> -> vector<128x128xf32>
    %c0_3 = arith.constant 0 : index
    %c0_4 = arith.constant 0 : index
    %4 = vector.load %arg3[%c0_3, %c0_4] : memref<1x128xf32, #tpu.memory_space<vmem>>, vector<1x128xf32>
    %5 = vector.broadcast %4 : vector<1x128xf32> to vector<128x128xf32>
    %6 = arith.addf %3, %5 : vector<128x128xf32>
    %cst_5 = arith.constant 0.000000e+00 : f32
    %7 = vector.broadcast %cst_5 : f32 to vector<128x128xf32>
    %8 = arith.maximumf %6, %7 : vector<128x128xf32>
    %9 = arith.truncf %8 : vector<128x128xf32> to vector<128x128xbf16>
    %c0_6 = arith.constant 0 : index
    %c0_7 = arith.constant 0 : index
    %10 = vector.load %arg4[%c0_6, %c0_7] : memref<128x128xbf16, #tpu.memory_space<vmem>>, vector<128x128xbf16>
    %cst_8 = arith.constant dense<0.000000e+00> : vector<128x128xf32>
    %11 = tpu.matmul %9, %10, %cst_8 {dimension_numbers = #tpu.dot_dimension_numbers<[1], [0], [0], [1], [0, 0, 1, 1], [], []>} : vector<128x128xbf16>, vector<128x128xbf16>, vector<128x128xf32> -> vector<128x128xf32>
    %c0_9 = arith.constant 0 : index
    %c0_10 = arith.constant 0 : index
    %12 = vector.load %arg5[%c0_9, %c0_10] : memref<1x128xf32, #tpu.memory_space<vmem>>, vector<1x128xf32>
    %13 = vector.broadcast %12 : vector<1x128xf32> to vector<128x128xf32>
    %14 = arith.addf %11, %13 : vector<128x128xf32>
    %cst_11 = arith.constant 0.000000e+00 : f32
    %15 = vector.broadcast %cst_11 : f32 to vector<128x128xf32>
    %16 = arith.maximumf %14, %15 : vector<128x128xf32>
    %c0_12 = arith.constant 0 : index
    %c0_13 = arith.constant 0 : index
    %17 = vector.load %arg6[%c0_12, %c0_13] : memref<1x128xf32, #tpu.memory_space<vmem>>, vector<1x128xf32>
    %18 = vector.broadcast %17 : vector<1x128xf32> to vector<128x128xf32>
    %19 = arith.mulf %16, %18 : vector<128x128xf32>
    %cst_14 = arith.constant dense<0.000000e+00> : vector<128xf32>
    %20 = vector.multi_reduction <add>, %19, %cst_14 [1] : vector<128x128xf32> to vector<128xf32>
    %21 = vector.shape_cast %20 : vector<128xf32> to vector<128x1xf32>
    %c0_15 = arith.constant 0 : index
    %c0_16 = arith.constant 0 : index
    %22 = memref.load %arg7[%c0_15, %c0_16] : memref<1x1xf32, #tpu.memory_space<smem>>
    %23 = vector.broadcast %22 : f32 to vector<128x1xf32>
    %24 = arith.addf %21, %23 : vector<128x1xf32>
    %25 = vector.shape_cast %24 : vector<128x1xf32> to vector<1x128xf32>
    %c0_17 = arith.constant 0 : index
    %c0_18 = arith.constant 0 : index
    %c0_19 = arith.constant 0 : index
    %26 = vector.load %arg8[%c0_17, %c0_18, %c0_19] : memref<1x1x128xf32, #tpu.memory_space<vmem>>, vector<1x1x128xf32>
    %27 = vector.shape_cast %26 : vector<1x1x128xf32> to vector<1x128xf32>
    %28 = vector.shape_cast %25 : vector<1x128xf32> to vector<1x1x128xf32>
    tpu.vector_store %arg8[%c0_17, %c0_18, %c0_19], %28 {strides = array<i32>} : memref<1x1x128xf32, #tpu.memory_space<vmem>>, vector<1x1x128xf32>,
    return
  }
  func.func @transform_0(%arg0: i32) -> (i32, i32) {
    %c0_i32 = arith.constant 0 : i32
    %c0_i32_0 = arith.constant 0 : i32
    return %arg0, %c0_i32 : i32, i32
  }
  func.func @transform_1(%arg0: i32) -> (i32, i32) {
    %c0_i32 = arith.constant 0 : i32
    %c0_i32_0 = arith.constant 0 : i32
    %c0_i32_1 = arith.constant 0 : i32
    return %c0_i32, %c0_i32_0 : i32, i32
  }
  func.func @transform_2(%arg0: i32) -> (i32, i32) {
    %c0_i32 = arith.constant 0 : i32
    %c0_i32_0 = arith.constant 0 : i32
    %c0_i32_1 = arith.constant 0 : i32
    return %c0_i32, %c0_i32_0 : i32, i32
  }
  func.func @transform_3(%arg0: i32) -> (i32, i32) {
    %c0_i32 = arith.constant 0 : i32
    %c0_i32_0 = arith.constant 0 : i32
    %c0_i32_1 = arith.constant 0 : i32
    return %c0_i32, %c0_i32_0 : i32, i32
  }
  func.func @transform_4(%arg0: i32) -> (i32, i32) {
    %c0_i32 = arith.constant 0 : i32
    %c0_i32_0 = arith.constant 0 : i32
    %c0_i32_1 = arith.constant 0 : i32
    return %c0_i32, %c0_i32_0 : i32, i32
  }
  func.func @transform_5(%arg0: i32) -> (i32, i32) {
    %c0_i32 = arith.constant 0 : i32
    %c0_i32_0 = arith.constant 0 : i32
    %c0_i32_1 = arith.constant 0 : i32
    return %c0_i32, %c0_i32_0 : i32, i32
  }
  func.func @transform_6(%arg0: i32) -> (i32, i32) {
    %c0_i32 = arith.constant 0 : i32
    %c0_i32_0 = arith.constant 0 : i32
    %c0_i32_1 = arith.constant 0 : i32
    return %c0_i32, %c0_i32_0 : i32, i32
  }
  func.func @transform_7(%arg0: i32) -> (i32, i32, i32) {
    %c0_i32 = arith.constant 0 : i32
    %c0_i32_0 = arith.constant 0 : i32
    %c0_i32_1 = arith.constant 0 : i32
    return %arg0, %c0_i32, %c0_i32_0 : i32, i32, i32
  }
}

module attributes {stable_mosaic.version = 11 : i64} {
  func.func @dnn_kernel(%arg0: i32, %arg1: memref<128x100xf32, #tpu.memory_space<vmem>>, %arg2: memref<100x128xbf16, #tpu.memory_space<vmem>>, %arg3: memref<1x128xf32, #tpu.memory_space<vmem>>, %arg4: memref<128x128xbf16, #tpu.memory_space<vmem>>, %arg5: memref<1x128xf32, #tpu.memory_space<vmem>>, %arg6: memref<1x128xf32, #tpu.memory_space<vmem>>, %arg7: memref<1x1xf32, #tpu.memory_space<smem>>, %arg8: memref<128x1xf32, #tpu.memory_space<vmem>>) attributes {dimension_semantics = [#tpu.dimension_semantics<parallel>], iteration_bounds = array<i64: 1>, scalar_prefetch = 0 : i64, scratch_operands = 0 : i64, tpu.core_type = #tpu.core_type<tc>, window_params = [{transform_indices = @transform_0, window_bounds = array<i64: 128, 100>}, {pipeline_mode = #tpu.pipeline_mode<synchronous>, transform_indices = @transform_1, window_bounds = array<i64: 100, 128>}, {pipeline_mode = #tpu.pipeline_mode<synchronous>, transform_indices = @transform_2, window_bounds = array<i64: 1, 128>}, {pipeline_mode = #tpu.pipeline_mode<synchronous>, transform_indices = @transform_3, window_bounds = array<i64: 128, 128>}, {pipeline_mode = #tpu.pipeline_mode<synchronous>, transform_indices = @transform_4, window_bounds = array<i64: 1, 128>}, {pipeline_mode = #tpu.pipeline_mode<synchronous>, transform_indices = @transform_5, window_bounds = array<i64: 1, 128>}, {transform_indices = @transform_6, window_bounds = array<i64: 1, 1>}, {transform_indices = @transform_7, window_bounds = array<i64: 128, 1>}]} {
    %c0 = arith.constant 0 : index
    %c0_0 = arith.constant 0 : index
    %0 = vector.load %arg1[%c0, %c0_0] : memref<128x100xf32, #tpu.memory_space<vmem>>, vector<128x100xf32>
    %1 = arith.truncf %0 : vector<128x100xf32> to vector<128x100xbf16>
    %c0_1 = arith.constant 0 : index
    %c0_2 = arith.constant 0 : index
    %2 = vector.load %arg2[%c0_1, %c0_2] : memref<100x128xbf16, #tpu.memory_space<vmem>>, vector<100x128xbf16>
    %cst = arith.constant dense<0.000000e+00> : vector<128x128xf32>
    %3 = tpu.matmul %1, %2, %cst {dimension_numbers = #tpu.dot_dimension_numbers<[1], [0], [0], [1], [0, 0, 1, 1], [], []>} : vector<128x100xbf16>, vector<100x128xbf16>, vector<128x128xf32> -> vector<128x128xf32>
    %c0_3 = arith.constant 0 : index
    %c0_4 = arith.constant 0 : index
    %4 = vector.load %arg3[%c0_3, %c0_4] : memref<1x128xf32, #tpu.memory_space<vmem>>, vector<1x128xf32>
    %5 = vector.broadcast %4 : vector<1x128xf32> to vector<128x128xf32>
    %6 = arith.addf %3, %5 : vector<128x128xf32>
    %cst_5 = arith.constant 0.000000e+00 : f32
    %7 = vector.broadcast %cst_5 : f32 to vector<128x128xf32>
    %8 = arith.maximumf %6, %7 : vector<128x128xf32>
    %9 = arith.truncf %8 : vector<128x128xf32> to vector<128x128xbf16>
    %c0_6 = arith.constant 0 : index
    %c0_7 = arith.constant 0 : index
    %10 = vector.load %arg4[%c0_6, %c0_7] : memref<128x128xbf16, #tpu.memory_space<vmem>>, vector<128x128xbf16>
    %cst_8 = arith.constant dense<0.000000e+00> : vector<128x128xf32>
    %11 = tpu.matmul %9, %10, %cst_8 {dimension_numbers = #tpu.dot_dimension_numbers<[1], [0], [0], [1], [0, 0, 1, 1], [], []>} : vector<128x128xbf16>, vector<128x128xbf16>, vector<128x128xf32> -> vector<128x128xf32>
    %c0_9 = arith.constant 0 : index
    %c0_10 = arith.constant 0 : index
    %12 = vector.load %arg5[%c0_9, %c0_10] : memref<1x128xf32, #tpu.memory_space<vmem>>, vector<1x128xf32>
    %13 = vector.broadcast %12 : vector<1x128xf32> to vector<128x128xf32>
    %14 = arith.addf %11, %13 : vector<128x128xf32>
    %cst_11 = arith.constant 0.000000e+00 : f32
    %15 = vector.broadcast %cst_11 : f32 to vector<128x128xf32>
    %16 = arith.maximumf %14, %15 : vector<128x128xf32>
    %c0_12 = arith.constant 0 : index
    %c0_13 = arith.constant 0 : index
    %17 = vector.load %arg6[%c0_12, %c0_13] : memref<1x128xf32, #tpu.memory_space<vmem>>, vector<1x128xf32>
    %18 = vector.broadcast %17 : vector<1x128xf32> to vector<128x128xf32>
    %19 = arith.mulf %16, %18 : vector<128x128xf32>
    %cst_14 = arith.constant dense<0.000000e+00> : vector<128xf32>
    %20 = vector.multi_reduction <add>, %19, %cst_14 [1] : vector<128x128xf32> to vector<128xf32>
    %21 = vector.shape_cast %20 : vector<128xf32> to vector<128x1xf32>
    %c0_15 = arith.constant 0 : index
    %c0_16 = arith.constant 0 : index
    %22 = memref.load %arg7[%c0_15, %c0_16] : memref<1x1xf32, #tpu.memory_space<smem>>
    %23 = vector.broadcast %22 : f32 to vector<128x1xf32>
    %24 = arith.addf %21, %23 : vector<128x1xf32>
    %c0_17 = arith.constant 0 : index
    %c0_18 = arith.constant 0 : index
    %25 = vector.load %arg8[%c0_17, %c0_18] : memref<128x1xf32, #tpu.memory_space<vmem>>, vector<128x1xf32>
    tpu.vector_store %arg8[%c0_17, %c0_18], %24 {strides = array<i32>} : memref<128x1xf32, #tpu.memory_space<vmem>>, vector<128x1xf32>,
    return
  }
  func.func @transform_0(%arg0: i32) -> (i32, i32) {
    %c0_i32 = arith.constant 0 : i32
    %c0_i32_0 = arith.constant 0 : i32
    return %arg0, %c0_i32 : i32, i32
  }
  func.func @transform_1(%arg0: i32) -> (i32, i32) {
    %c0_i32 = arith.constant 0 : i32
    %c0_i32_0 = arith.constant 0 : i32
    %c0_i32_1 = arith.constant 0 : i32
    return %c0_i32, %c0_i32_0 : i32, i32
  }
  func.func @transform_2(%arg0: i32) -> (i32, i32) {
    %c0_i32 = arith.constant 0 : i32
    %c0_i32_0 = arith.constant 0 : i32
    %c0_i32_1 = arith.constant 0 : i32
    return %c0_i32, %c0_i32_0 : i32, i32
  }
  func.func @transform_3(%arg0: i32) -> (i32, i32) {
    %c0_i32 = arith.constant 0 : i32
    %c0_i32_0 = arith.constant 0 : i32
    %c0_i32_1 = arith.constant 0 : i32
    return %c0_i32, %c0_i32_0 : i32, i32
  }
  func.func @transform_4(%arg0: i32) -> (i32, i32) {
    %c0_i32 = arith.constant 0 : i32
    %c0_i32_0 = arith.constant 0 : i32
    %c0_i32_1 = arith.constant 0 : i32
    return %c0_i32, %c0_i32_0 : i32, i32
  }
  func.func @transform_5(%arg0: i32) -> (i32, i32) {
    %c0_i32 = arith.constant 0 : i32
    %c0_i32_0 = arith.constant 0 : i32
    %c0_i32_1 = arith.constant 0 : i32
    return %c0_i32, %c0_i32_0 : i32, i32
  }
  func.func @transform_6(%arg0: i32) -> (i32, i32) {
    %c0_i32 = arith.constant 0 : i32
    %c0_i32_0 = arith.constant 0 : i32
    %c0_i32_1 = arith.constant 0 : i32
    return %c0_i32, %c0_i32_0 : i32, i32
  }
  func.func @transform_7(%arg0: i32) -> (i32, i32) {
    %c0_i32 = arith.constant 0 : i32
    %c0_i32_0 = arith.constant 0 : i32
    return %arg0, %c0_i32 : i32, i32
  }
}

</mosaic_0001>

<llo_original>
// kernel: tpu_custom_call.1
$region0: #{tpu_custom_call.1}
  #allocation0 [shape = 'u32[]', space=smem, size = 0x4, offset = 0x4, fixed_abs, tag = 'smem constant byte address 0x4 - core index']
  #allocation1 [shape = 'u32[144,128]{1,0:T(1,128)}', space=vmem, size = 0x12000, scoped, tag = 'internal scratch']
  #allocation2 [shape = 'f32[1,1]{1,0:T(1,128)S(6)}', space=smem, size = 0x200, scoped, tag = 'scoped memory for tpu_custom_call.1']
  %s0 = inlined_call_operand.vmem [shape: f32[128,100], index: 0, kind: input, shape index: {}]
  %s1 = inlined_call_operand.vmem [shape: bf16[100,128], index: 1, kind: input, shape index: {}]
  %s2 = inlined_call_operand.vmem [shape: f32[1,128], index: 2, kind: input, shape index: {}]
  %s3 = inlined_call_operand.vmem [shape: bf16[128,128], index: 3, kind: input, shape index: {}]
  %s4 = inlined_call_operand.vmem [shape: f32[1,128], index: 4, kind: input, shape index: {}]
  %s5 = inlined_call_operand.vmem [shape: f32[1,128], index: 5, kind: input, shape index: {}]
  %s6 = inlined_call_operand.<no memory space> [shape: f32[1,1], index: 6, kind: input, shape index: {}]
  %s7 = inlined_call_operand.hbm [shape: f32[1,1,128], index: 7, kind: output, shape index: {}]
  %s8 = sld [smem:[#allocation0]]
  $region38: #{tpu_custom_call.1} parent=0
    _
  %s10 = ssub.s32 1, %s8
  %s11 = scalar_select 0, %s10, %s8
  %12 = sst [smem:[#allocation2]] %s6
  $region1: #{tpu_custom_call.1} parent=0
    #allocation3 [shape = 'u8[512]{0}', space=vmem, size = 0x400, scoped, tag = 'output window, operand 0, single buffered']
    #allocation4 [shape = 's32[1]{0}', space=sflag, size = 0x4, scoped, tag = 'scoped memory for tpu_custom_call.1']
    %13 = vsyncpa [#allocation4], 0
    // Predicated region
    $region2: #{tpu_custom_call.1} parent=1 // pred_check
      _
    $region3: #{tpu_custom_call.1} parent=1 // pred_check_branch
      %15 = sbr.rel (0) target = $region5
    $region4: #{tpu_custom_call.1} parent=1 // pred_region
      _
    $region5: #{tpu_custom_call.1} parent=1 // pred_fallthru
      _
    // Predicated region
    $region6: #{tpu_custom_call.1} parent=1 // pred_check
      _
    $region7: #{tpu_custom_call.1} parent=1 // pred_check_branch
      %17 = sbr.rel (0) target = $region9
    $region8: #{tpu_custom_call.1} parent=1 // pred_region
      _
    $region9: #{tpu_custom_call.1} parent=1 // pred_fallthru
      _
    // Predicated region
    $region10: #{tpu_custom_call.1} parent=1 // pred_check
      _
    $region11: #{tpu_custom_call.1} parent=1 // pred_check_branch
      %19 = sbr.rel (0) target = $region13
    $region12: #{tpu_custom_call.1} parent=1 // pred_region
      _
    $region13: #{tpu_custom_call.1} parent=1 // pred_fallthru
      _
    // Predicated region
    $region14: #{tpu_custom_call.1} parent=1 // pred_check
      _
    $region15: #{tpu_custom_call.1} parent=1 // pred_check_branch
      %21 = sbr.rel (0) target = $region17
    $region16: #{tpu_custom_call.1} parent=1 // pred_region
      _
    $region17: #{tpu_custom_call.1} parent=1 // pred_fallthru
      _
    // Predicated region
    $region18: #{tpu_custom_call.1} parent=1 // pred_check
      _
    $region19: #{tpu_custom_call.1} parent=1 // pred_check_branch
      %23 = sbr.rel (0) target = $region21
    $region20: #{tpu_custom_call.1} parent=1 // pred_region
      _
    $region21: #{tpu_custom_call.1} parent=1 // pred_fallthru
      _
    // Predicated region
    $region22: #{tpu_custom_call.1} parent=1 // pred_check
      _
    $region23: #{tpu_custom_call.1} parent=1 // pred_check_branch
      %25 = sbr.rel (0) target = $region25
    $region24: #{tpu_custom_call.1} parent=1 // pred_region
      _
    $region25: #{tpu_custom_call.1} parent=1 // pred_fallthru
      _
    // Predicated region
    $region26: #{tpu_custom_call.1} parent=1 // pred_check
      _
    $region27: #{tpu_custom_call.1} parent=1 // pred_check_branch
      %27 = sbr.rel (0) target = $region29
    $region28: #{tpu_custom_call.1} parent=1 // pred_region
      _
    $region29: #{tpu_custom_call.1} parent=1 // pred_fallthru
      _
    %v29 = vld [vmem:[%s0] sm:$0xff]
    %v30 = vld [vmem:[%s0 + $0x8] sm:$0xff]
    %v31 = vld [vmem:[%s0 + $0x10] sm:$0xff]
    %v32 = vld [vmem:[%s0 + $0x18] sm:$0xff]
    %v33 = vld [vmem:[%s0 + $0x20] sm:$0xff]
    %v34 = vld [vmem:[%s0 + $0x28] sm:$0xff]
    %v35 = vld [vmem:[%s0 + $0x30] sm:$0xff]
    %v36 = vld [vmem:[%s0 + $0x38] sm:$0xff]
    %v37 = vld [vmem:[%s0 + $0x40] sm:$0xff]
    %v38 = vld [vmem:[%s0 + $0x48] sm:$0xff]
    %v39 = vld [vmem:[%s0 + $0x50] sm:$0xff]
    %v40 = vld [vmem:[%s0 + $0x58] sm:$0xff]
    %v41 = vld [vmem:[%s0 + $0x60] sm:$0xff]
    %v42 = vld [vmem:[%s0 + $0x68] sm:$0xff]
    %v43 = vld [vmem:[%s0 + $0x70] sm:$0xff]
    %v44 = vld [vmem:[%s0 + $0x78] sm:$0xff]
    %v45 = vpack.c.bf16 %v30, %v29
    %v46 = vpack.c.bf16 %v32, %v31
    %v47 = vpack.c.bf16 %v34, %v33
    %v48 = vpack.c.bf16 %v36, %v35
    %v49 = vpack.c.bf16 %v38, %v37
    %v50 = vpack.c.bf16 %v40, %v39
    %v51 = vpack.c.bf16 %v42, %v41
    %v52 = vpack.c.bf16 %v44, %v43
    %v53 = vld [vmem:[%s1] sm:$0xf]
    %v54 = vld [vmem:[%s1 + $0x4] sm:$0xf]
    %v55 = vld [vmem:[%s1 + $0x8] sm:$0xf]
    %v56 = vld [vmem:[%s1 + $0xc] sm:$0xf]
    %v57 = vld [vmem:[%s1 + $0x10] sm:$0xf]
    %v58 = vld [vmem:[%s1 + $0x14] sm:$0xf]
    %v59 = vld [vmem:[%s1 + $0x18] sm:$0xf]
    %v60 = vld [vmem:[%s1 + $0x1c] sm:$0xf]
    %v61 = vld [vmem:[%s1 + $0x20] sm:$0xf]
    %v62 = vld [vmem:[%s1 + $0x24] sm:$0xf]
    %v63 = vld [vmem:[%s1 + $0x28] sm:$0xf]
    %v64 = vld [vmem:[%s1 + $0x2c] sm:$0xf]
    %v65 = vld [vmem:[%s1 + $0x30] sm:$0x3]
    %v66 = vld [vmem:[%s2] sm:$0x1]
    %v68 = vlaneseq
    %v69 = vshrl.u32 %v68, 7
    %v70 = vsub.s32 0, %v69
    %v71 = vrot.slane %v66, %v70
    %v86 = vunpack.c.l.b16 %v53
    %v87 = vunpack.c.l.b16 %v54
    %v88 = vunpack.c.l.b16 %v55
    %v89 = vunpack.c.l.b16 %v56
    %v90 = vunpack.c.l.b16 %v57
    %v91 = vunpack.c.l.b16 %v58
    %v92 = vunpack.c.l.b16 %v59
    %v93 = vunpack.c.l.b16 %v60
    %v94 = vunpack.c.l.b16 %v61
    %v95 = vunpack.c.l.b16 %v62
    %v96 = vunpack.c.l.b16 %v63
    %v97 = vunpack.c.l.b16 %v64
    %v98 = vunpack.c.l.b16 %v65
    %v99 = vpack.c.b16 %v87, %v86
    %v100 = vpack.c.b16 %v89, %v88
    %v101 = vpack.c.b16 %v91, %v90
    %v102 = vpack.c.b16 %v93, %v92
    %v103 = vpack.c.b16 %v95, %v94
    %v104 = vpack.c.b16 %v97, %v96
    %v105 = vpack.c.b16 %v98, %v98
    %vm112 = vcmask 818176
    %v114 = vsel %vm112, %v45, 0
    %v117 = vsel %vm112, %v46, 0
    %v120 = vsel %vm112, %v47, 0
    %v123 = vsel %vm112, %v48, 0
    %v126 = vsel %vm112, %v49, 0
    %v129 = vsel %vm112, %v50, 0
    %v132 = vsel %vm112, %v51, 0
    %v135 = vsel %vm112, %v52, 0
    %vm137 = vcmask 1041408
    %v139 = vsel %vm137, %v105, 0
    %141 = vmatprep.subr.bf16.mxu0 0
    %142 = vmatpush1.bf16.msra.mxu0 %v99
    %143 = vmatprep.subr.bf16.mxu0 0
    %144 = vmatpush1.bf16.msra.mxu0 %v100
    %145 = vmatprep.subr.bf16.mxu0 0
    %146 = vmatpush1.bf16.msra.mxu0 %v101
    %147 = vmatprep.subr.bf16.mxu0 0
    %148 = vmatpush1.bf16.msra.mxu0 %v102
    %149 = vmatprep.subr.bf16.mxu0 0
    %150 = vmatpush1.bf16.msra.mxu0 %v103
    %151 = vmatprep.subr.bf16.mxu0 0
    %152 = vmatpush1.bf16.msra.mxu0 %v104
    %153 = vmatprep.subr.bf16.mxu0 0
    %154 = vmatpush1.bf16.msra.mxu0 %v139
    %155 = vmatprep.subr.bf16.mxu0 0
    %156 = vmatpush1.bf16.msra.mxu0 0
    %157 = vmatprep.subr.bf16.mxu0 0
    %158 = vmatpush1.bf16.msra.mxu0 0
    %159 = vmatprep.subr.bf16.mxu0 0
    %160 = vmatpush1.bf16.msra.mxu0 0
    %161 = vmatprep.subr.bf16.mxu0 0
    %162 = vmatpush1.bf16.msra.mxu0 0
    %163 = vmatprep.subr.bf16.mxu0 0
    %164 = vmatpush1.bf16.msra.mxu0 0
    %165 = vmatprep.subr.bf16.mxu0 0
    %166 = vmatpush1.bf16.msra.mxu0 0
    %167 = vmatprep.subr.bf16.mxu0 0
    %168 = vmatpush1.bf16.msra.mxu0 0
    %169 = vmatprep.subr.bf16.mxu0 0
    %170 = vmatpush1.bf16.msra.mxu0 0
    %171 = vmatprep.subr.bf16.mxu0 0
    %172 = vmatpush1.bf16.msra.mxu0 0
    %173 = vmatprep.mubr.bf16.mxu0 0
    %174 = vmatmul.mubr.bf16.gmra.mrb[0].mxu0 %v114
    %v175 = vpop.f32.mrb[0].mxu0
    %v176 = vadd.f32 %v71, %v175
    %v177 = vpop.f32.mrb[0].mxu0
    %v178 = vpop.f32.mrb[0].mxu0
    %v179 = vadd.f32 %v71, %v178
    %v180 = vpop.f32.mrb[0].mxu0
    %181 = vmatprep.mubr.bf16.mxu0 0
    %182 = vmatmul.mubr.bf16.gmra.mrb[0].mxu0 %v117
    %v183 = vpop.f32.mrb[0].mxu0
    %v184 = vadd.f32 %v71, %v183
    %v185 = vpop.f32.mrb[0].mxu0
    %v186 = vpop.f32.mrb[0].mxu0
    %v187 = vadd.f32 %v71, %v186
    %v188 = vpop.f32.mrb[0].mxu0
    %189 = vmatprep.mubr.bf16.mxu0 0
    %190 = vmatmul.mubr.bf16.gmra.mrb[0].mxu0 %v120
    %v191 = vpop.f32.mrb[0].mxu0
    %v192 = vadd.f32 %v71, %v191
    %v193 = vpop.f32.mrb[0].mxu0
    %v194 = vpop.f32.mrb[0].mxu0
    %v195 = vadd.f32 %v71, %v194
    %v196 = vpop.f32.mrb[0].mxu0
    %197 = vmatprep.mubr.bf16.mxu0 0
    %198 = vmatmul.mubr.bf16.gmra.mrb[0].mxu0 %v123
    %v199 = vpop.f32.mrb[0].mxu0
    %v200 = vadd.f32 %v71, %v199
    %v201 = vpop.f32.mrb[0].mxu0
    %v202 = vpop.f32.mrb[0].mxu0
    %v203 = vadd.f32 %v71, %v202
    %v204 = vpop.f32.mrb[0].mxu0
    %205 = vmatprep.mubr.bf16.mxu0 0
    %206 = vmatmul.mubr.bf16.gmra.mrb[0].mxu0 %v126
    %v207 = vpop.f32.mrb[0].mxu0
    %v208 = vadd.f32 %v71, %v207
    %v209 = vpop.f32.mrb[0].mxu0
    %v210 = vpop.f32.mrb[0].mxu0
    %v211 = vadd.f32 %v71, %v210
    %v212 = vpop.f32.mrb[0].mxu0
    %213 = vmatprep.mubr.bf16.mxu0 0
    %214 = vmatmul.mubr.bf16.gmra.mrb[0].mxu0 %v129
    %v215 = vpop.f32.mrb[0].mxu0
    %v216 = vadd.f32 %v71, %v215
    %v217 = vpop.f32.mrb[0].mxu0
    %v218 = vpop.f32.mrb[0].mxu0
    %v219 = vadd.f32 %v71, %v218
    %v220 = vpop.f32.mrb[0].mxu0
    %221 = vmatprep.mubr.bf16.mxu0 0
    %222 = vmatmul.mubr.bf16.gmra.mrb[0].mxu0 %v132
    %v223 = vpop.f32.mrb[0].mxu0
    %v224 = vadd.f32 %v71, %v223
    %v225 = vpop.f32.mrb[0].mxu0
    %v226 = vpop.f32.mrb[0].mxu0
    %v227 = vadd.f32 %v71, %v226
    %v228 = vpop.f32.mrb[0].mxu0
    %229 = vmatprep.mubr.bf16.mxu0 0
    %230 = vmatmul.mubr.bf16.gmra.mrb[0].mxu0 %v135
    %v231 = vpop.f32.mrb[0].mxu0
    %v232 = vadd.f32 %v71, %v231
    %v233 = vpop.f32.mrb[0].mxu0
    %v234 = vpop.f32.mrb[0].mxu0
    %v235 = vadd.f32 %v71, %v234
    %v236 = vpop.f32.mrb[0].mxu0
    %237 = vdwg.mxu0
    %v238 = vmax.f32 %v176, 0.0
    %v239 = vmax.f32 %v179, 0.0
    %v240 = vmax.f32 %v184, 0.0
    %v241 = vmax.f32 %v187, 0.0
    %v242 = vmax.f32 %v192, 0.0
    %v243 = vmax.f32 %v195, 0.0
    %v244 = vmax.f32 %v200, 0.0
    %v245 = vmax.f32 %v203, 0.0
    %v246 = vmax.f32 %v208, 0.0
    %v247 = vmax.f32 %v211, 0.0
    %v248 = vmax.f32 %v216, 0.0
    %v249 = vmax.f32 %v219, 0.0
    %v250 = vmax.f32 %v224, 0.0
    %v251 = vmax.f32 %v227, 0.0
    %v252 = vmax.f32 %v232, 0.0
    %v253 = vmax.f32 %v235, 0.0
    %v254 = vpack.c.bf16 %v239, %v238
    %v255 = vpack.c.bf16 %v241, %v240
    %v256 = vpack.c.bf16 %v243, %v242
    %v257 = vpack.c.bf16 %v245, %v244
    %v258 = vpack.c.bf16 %v247, %v246
    %v259 = vpack.c.bf16 %v249, %v248
    %v260 = vpack.c.bf16 %v251, %v250
    %v261 = vpack.c.bf16 %v253, %v252
    %v262 = vld [vmem:[%s3] sm:$0xf]
    %v263 = vld [vmem:[%s3 + $0x4] sm:$0xf]
    %v264 = vld [vmem:[%s3 + $0x8] sm:$0xf]
    %v265 = vld [vmem:[%s3 + $0xc] sm:$0xf]
    %v266 = vld [vmem:[%s3 + $0x10] sm:$0xf]
    %v267 = vld [vmem:[%s3 + $0x14] sm:$0xf]
    %v268 = vld [vmem:[%s3 + $0x18] sm:$0xf]
    %v269 = vld [vmem:[%s3 + $0x1c] sm:$0xf]
    %v270 = vld [vmem:[%s3 + $0x20] sm:$0xf]
    %v271 = vld [vmem:[%s3 + $0x24] sm:$0xf]
    %v272 = vld [vmem:[%s3 + $0x28] sm:$0xf]
    %v273 = vld [vmem:[%s3 + $0x2c] sm:$0xf]
    %v274 = vld [vmem:[%s3 + $0x30] sm:$0xf]
    %v275 = vld [vmem:[%s3 + $0x34] sm:$0xf]
    %v276 = vld [vmem:[%s3 + $0x38] sm:$0xf]
    %v277 = vld [vmem:[%s3 + $0x3c] sm:$0xf]
    %v278 = vld [vmem:[%s4] sm:$0x1]
    %v280 = vlaneseq
    %v281 = vshrl.u32 %v280, 7
    %v282 = vsub.s32 0, %v281
    %v283 = vrot.slane %v278, %v282
    %v301 = vunpack.c.l.b16 %v262
    %v302 = vunpack.c.l.b16 %v263
    %v303 = vunpack.c.l.b16 %v264
    %v304 = vunpack.c.l.b16 %v265
    %v305 = vunpack.c.l.b16 %v266
    %v306 = vunpack.c.l.b16 %v267
    %v307 = vunpack.c.l.b16 %v268
    %v308 = vunpack.c.l.b16 %v269
    %v309 = vunpack.c.l.b16 %v270
    %v310 = vunpack.c.l.b16 %v271
    %v311 = vunpack.c.l.b16 %v272
    %v312 = vunpack.c.l.b16 %v273
    %v313 = vunpack.c.l.b16 %v274
    %v314 = vunpack.c.l.b16 %v275
    %v315 = vunpack.c.l.b16 %v276
    %v316 = vunpack.c.l.b16 %v277
    %v317 = vpack.c.b16 %v302, %v301
    %v318 = vpack.c.b16 %v304, %v303
    %v319 = vpack.c.b16 %v306, %v305
    %v320 = vpack.c.b16 %v308, %v307
    %v321 = vpack.c.b16 %v310, %v309
    %v322 = vpack.c.b16 %v312, %v311
    %v323 = vpack.c.b16 %v314, %v313
    %v324 = vpack.c.b16 %v316, %v315
    %333 = vmatprep.subr.bf16.mxu0 0
    %334 = vmatpush1.bf16.msra.mxu0 %v317
    %335 = vmatprep.subr.bf16.mxu0 0
    %336 = vmatpush1.bf16.msra.mxu0 %v318
    %337 = vmatprep.subr.bf16.mxu0 0
    %338 = vmatpush1.bf16.msra.mxu0 %v319
    %339 = vmatprep.subr.bf16.mxu0 0
    %340 = vmatpush1.bf16.msra.mxu0 %v320
    %341 = vmatprep.subr.bf16.mxu0 0
    %342 = vmatpush1.bf16.msra.mxu0 %v321
    %343 = vmatprep.subr.bf16.mxu0 0
    %344 = vmatpush1.bf16.msra.mxu0 %v322
    %345 = vmatprep.subr.bf16.mxu0 0
    %346 = vmatpush1.bf16.msra.mxu0 %v323
    %347 = vmatprep.subr.bf16.mxu0 0
    %348 = vmatpush1.bf16.msra.mxu0 %v324
    %349 = vmatprep.subr.bf16.mxu0 0
    %350 = vmatpush1.bf16.msra.mxu0 0
    %351 = vmatprep.subr.bf16.mxu0 0
    %352 = vmatpush1.bf16.msra.mxu0 0
    %353 = vmatprep.subr.bf16.mxu0 0
    %354 = vmatpush1.bf16.msra.mxu0 0
    %355 = vmatprep.subr.bf16.mxu0 0
    %356 = vmatpush1.bf16.msra.mxu0 0
    %357 = vmatprep.subr.bf16.mxu0 0
    %358 = vmatpush1.bf16.msra.mxu0 0
    %359 = vmatprep.subr.bf16.mxu0 0
    %360 = vmatpush1.bf16.msra.mxu0 0
    %361 = vmatprep.subr.bf16.mxu0 0
    %362 = vmatpush1.bf16.msra.mxu0 0
    %363 = vmatprep.subr.bf16.mxu0 0
    %364 = vmatpush1.bf16.msra.mxu0 0
    %365 = vmatprep.mubr.bf16.mxu0 0
    %366 = vmatmul.mubr.bf16.gmra.mrb[0].mxu0 %v254
    %v367 = vpop.f32.mrb[0].mxu0
    %v368 = vadd.f32 %v283, %v367
    %v369 = vpop.f32.mrb[0].mxu0
    %v370 = vpop.f32.mrb[0].mxu0
    %v371 = vadd.f32 %v283, %v370
    %v372 = vpop.f32.mrb[0].mxu0
    %373 = vmatprep.mubr.bf16.mxu0 0
    %374 = vmatmul.mubr.bf16.gmra.mrb[0].mxu0 %v255
    %v375 = vpop.f32.mrb[0].mxu0
    %v376 = vadd.f32 %v283, %v375
    %v377 = vpop.f32.mrb[0].mxu0
    %v378 = vpop.f32.mrb[0].mxu0
    %v379 = vadd.f32 %v283, %v378
    %v380 = vpop.f32.mrb[0].mxu0
    %381 = vmatprep.mubr.bf16.mxu0 0
    %382 = vmatmul.mubr.bf16.gmra.mrb[0].mxu0 %v256
    %v383 = vpop.f32.mrb[0].mxu0
    %v384 = vadd.f32 %v283, %v383
    %v385 = vpop.f32.mrb[0].mxu0
    %v386 = vpop.f32.mrb[0].mxu0
    %v387 = vadd.f32 %v283, %v386
    %v388 = vpop.f32.mrb[0].mxu0
    %389 = vmatprep.mubr.bf16.mxu0 0
    %390 = vmatmul.mubr.bf16.gmra.mrb[0].mxu0 %v257
    %v391 = vpop.f32.mrb[0].mxu0
    %v392 = vadd.f32 %v283, %v391
    %v393 = vpop.f32.mrb[0].mxu0
    %v394 = vpop.f32.mrb[0].mxu0
    %v395 = vadd.f32 %v283, %v394
    %v396 = vpop.f32.mrb[0].mxu0
    %397 = vmatprep.mubr.bf16.mxu0 0
    %398 = vmatmul.mubr.bf16.gmra.mrb[0].mxu0 %v258
    %v399 = vpop.f32.mrb[0].mxu0
    %v400 = vadd.f32 %v283, %v399
    %v401 = vpop.f32.mrb[0].mxu0
    %v402 = vpop.f32.mrb[0].mxu0
    %v403 = vadd.f32 %v283, %v402
    %v404 = vpop.f32.mrb[0].mxu0
    %405 = vmatprep.mubr.bf16.mxu0 0
    %406 = vmatmul.mubr.bf16.gmra.mrb[0].mxu0 %v259
    %v407 = vpop.f32.mrb[0].mxu0
    %v408 = vadd.f32 %v283, %v407
    %v409 = vpop.f32.mrb[0].mxu0
    %v410 = vpop.f32.mrb[0].mxu0
    %v411 = vadd.f32 %v283, %v410
    %v412 = vpop.f32.mrb[0].mxu0
    %413 = vmatprep.mubr.bf16.mxu0 0
    %414 = vmatmul.mubr.bf16.gmra.mrb[0].mxu0 %v260
    %v415 = vpop.f32.mrb[0].mxu0
    %v416 = vadd.f32 %v283, %v415
    %v417 = vpop.f32.mrb[0].mxu0
    %v418 = vpop.f32.mrb[0].mxu0
    %v419 = vadd.f32 %v283, %v418
    %v420 = vpop.f32.mrb[0].mxu0
    %421 = vmatprep.mubr.bf16.mxu0 0
    %422 = vmatmul.mubr.bf16.gmra.mrb[0].mxu0 %v261
    %v423 = vpop.f32.mrb[0].mxu0
    %v424 = vadd.f32 %v283, %v423
    %v425 = vpop.f32.mrb[0].mxu0
    %v426 = vpop.f32.mrb[0].mxu0
    %v427 = vadd.f32 %v283, %v426
    %v428 = vpop.f32.mrb[0].mxu0
    %429 = vdwg.mxu0
    %v430 = vmax.f32 %v368, 0.0
    %v431 = vmax.f32 %v371, 0.0
    %v432 = vmax.f32 %v376, 0.0
    %v433 = vmax.f32 %v379, 0.0
    %v434 = vmax.f32 %v384, 0.0
    %v435 = vmax.f32 %v387, 0.0
    %v436 = vmax.f32 %v392, 0.0
    %v437 = vmax.f32 %v395, 0.0
    %v438 = vmax.f32 %v400, 0.0
    %v439 = vmax.f32 %v403, 0.0
    %v440 = vmax.f32 %v408, 0.0
    %v441 = vmax.f32 %v411, 0.0
    %v442 = vmax.f32 %v416, 0.0
    %v443 = vmax.f32 %v419, 0.0
    %v444 = vmax.f32 %v424, 0.0
    %v445 = vmax.f32 %v427, 0.0
    %v446 = vld [vmem:[%s5] sm:$0x1]
    %v448 = vlaneseq
    %v449 = vshrl.u32 %v448, 7
    %v450 = vsub.s32 0, %v449
    %v451 = vrot.slane %v446, %v450
    %v453 = vmul.f32 %v430, %v451
    %v454 = vmul.f32 %v431, %v451
    %v455 = vmul.f32 %v432, %v451
    %v456 = vmul.f32 %v433, %v451
    %v457 = vmul.f32 %v434, %v451
    %v458 = vmul.f32 %v435, %v451
    %v459 = vmul.f32 %v436, %v451
    %v460 = vmul.f32 %v437, %v451
    %v461 = vmul.f32 %v438, %v451
    %v462 = vmul.f32 %v439, %v451
    %v463 = vmul.f32 %v440, %v451
    %v464 = vmul.f32 %v441, %v451
    %v465 = vmul.f32 %v442, %v451
    %v466 = vmul.f32 %v443, %v451
    %v467 = vmul.f32 %v444, %v451
    %v468 = vmul.f32 %v445, %v451
    %469 = vadd.xlane.f32.xlu0 %v453
    %v470 = vpop.xlane.xlu0 %469
    %471 = vadd.xlane.f32.xlu0 %v454
    %v472 = vpop.xlane.xlu0 %471
    %473 = vadd.xlane.f32.xlu0 %v455
    %v474 = vpop.xlane.xlu0 %473
    %475 = vadd.xlane.f32.xlu0 %v456
    %v476 = vpop.xlane.xlu0 %475
    %477 = vadd.xlane.f32.xlu0 %v457
    %v478 = vpop.xlane.xlu0 %477
    %479 = vadd.xlane.f32.xlu0 %v458
    %v480 = vpop.xlane.xlu0 %479
    %481 = vadd.xlane.f32.xlu0 %v459
    %v482 = vpop.xlane.xlu0 %481
    %483 = vadd.xlane.f32.xlu0 %v460
    %v484 = vpop.xlane.xlu0 %483
    %485 = vadd.xlane.f32.xlu0 %v461
    %v486 = vpop.xlane.xlu0 %485
    %487 = vadd.xlane.f32.xlu0 %v462
    %v488 = vpop.xlane.xlu0 %487
    %489 = vadd.xlane.f32.xlu0 %v463
    %v490 = vpop.xlane.xlu0 %489
    %491 = vadd.xlane.f32.xlu0 %v464
    %v492 = vpop.xlane.xlu0 %491
    %493 = vadd.xlane.f32.xlu0 %v465
    %v494 = vpop.xlane.xlu0 %493
    %495 = vadd.xlane.f32.xlu0 %v466
    %v496 = vpop.xlane.xlu0 %495
    %497 = vadd.xlane.f32.xlu0 %v467
    %v498 = vpop.xlane.xlu0 %497
    %499 = vadd.xlane.f32.xlu0 %v468
    %v500 = vpop.xlane.xlu0 %499
    %s501 = sld [smem:[#allocation2]]
    %v502 = vstv %s501
    %v503 = vadd.f32 %v470, %v502
    %v504 = vadd.f32 %v472, %v502
    %v505 = vadd.f32 %v474, %v502
    %v506 = vadd.f32 %v476, %v502
    %v507 = vadd.f32 %v478, %v502
    %v508 = vadd.f32 %v480, %v502
    %v509 = vadd.f32 %v482, %v502
    %v510 = vadd.f32 %v484, %v502
    %v511 = vadd.f32 %v486, %v502
    %v512 = vadd.f32 %v488, %v502
    %v513 = vadd.f32 %v490, %v502
    %v514 = vadd.f32 %v492, %v502
    %v515 = vadd.f32 %v494, %v502
    %v516 = vadd.f32 %v496, %v502
    %v517 = vadd.f32 %v498, %v502
    %v518 = vadd.f32 %v500, %v502
    %v535 = vlaneseq
    %v536 = vand.u32 %v535, 127
    %v537 = vlaneseq
    %v538 = vshrl.u32 %v537, 7
    %v539 = vsub.s32 %v536, %v538
    %v540 = vrot.slane %v503, %v539
    %v541 = vadd.s32 %v536, 4294967288
    %v542 = vlaneseq
    %v543 = vshrl.u32 %v542, 7
    %v544 = vsub.s32 %v541, %v543
    %v545 = vrot.slane %v504, %v544
    %vm546 = vcmask 130112
    %v547 = vsel %vm546, %v545, %v540
    %v548 = vadd.s32 %v536, 4294967280
    %v549 = vlaneseq
    %v550 = vshrl.u32 %v549, 7
    %v551 = vsub.s32 %v548, %v550
    %v552 = vrot.slane %v505, %v551
    %vm553 = vcmask 195712
    %v554 = vsel %vm553, %v552, %v547
    %v555 = vadd.s32 %v536, 4294967272
    %v556 = vlaneseq
    %v557 = vshrl.u32 %v556, 7
    %v558 = vsub.s32 %v555, %v557
    %v559 = vrot.slane %v506, %v558
    %vm560 = vcmask 261312
    %v561 = vsel %vm560, %v559, %v554
    %v562 = vadd.s32 %v536, 4294967264
    %v563 = vlaneseq
    %v564 = vshrl.u32 %v563, 7
    %v565 = vsub.s32 %v562, %v564
    %v566 = vrot.slane %v507, %v565
    %vm567 = vcmask 326912
    %v568 = vsel %vm567, %v566, %v561
    %v569 = vadd.s32 %v536, 4294967256
    %v570 = vlaneseq
    %v571 = vshrl.u32 %v570, 7
    %v572 = vsub.s32 %v569, %v571
    %v573 = vrot.slane %v508, %v572
    %vm574 = vcmask 392512
    %v575 = vsel %vm574, %v573, %v568
    %v576 = vadd.s32 %v536, 4294967248
    %v577 = vlaneseq
    %v578 = vshrl.u32 %v577, 7
    %v579 = vsub.s32 %v576, %v578
    %v580 = vrot.slane %v509, %v579
    %vm581 = vcmask 458112
    %v582 = vsel %vm581, %v580, %v575
    %v583 = vadd.s32 %v536, 4294967240
    %v584 = vlaneseq
    %v585 = vshrl.u32 %v584, 7
    %v586 = vsub.s32 %v583, %v585
    %v587 = vrot.slane %v510, %v586
    %vm588 = vcmask 523712
    %v589 = vsel %vm588, %v587, %v582
    %v590 = vadd.s32 %v536, 4294967232
    %v591 = vlaneseq
    %v592 = vshrl.u32 %v591, 7
    %v593 = vsub.s32 %v590, %v592
    %v594 = vrot.slane %v511, %v593
    %vm595 = vcmask 589312
    %v596 = vsel %vm595, %v594, %v589
    %v597 = vadd.s32 %v536, 4294967224
    %v598 = vlaneseq
    %v599 = vshrl.u32 %v598, 7
    %v600 = vsub.s32 %v597, %v599
    %v601 = vrot.slane %v512, %v600
    %vm602 = vcmask 654912
    %v603 = vsel %vm602, %v601, %v596
    %v604 = vadd.s32 %v536, 4294967216
    %v605 = vlaneseq
    %v606 = vshrl.u32 %v605, 7
    %v607 = vsub.s32 %v604, %v606
    %v608 = vrot.slane %v513, %v607
    %vm609 = vcmask 720512
    %v610 = vsel %vm609, %v608, %v603
    %v611 = vadd.s32 %v536, 4294967208
    %v612 = vlaneseq
    %v613 = vshrl.u32 %v612, 7
    %v614 = vsub.s32 %v611, %v613
    %v615 = vrot.slane %v514, %v614
    %vm616 = vcmask 786112
    %v617 = vsel %vm616, %v615, %v610
    %v618 = vadd.s32 %v536, 4294967200
    %v619 = vlaneseq
    %v620 = vshrl.u32 %v619, 7
    %v621 = vsub.s32 %v618, %v620
    %v622 = vrot.slane %v515, %v621
    %vm623 = vcmask 851712
    %v624 = vsel %vm623, %v622, %v617
    %v625 = vadd.s32 %v536, 4294967192
    %v626 = vlaneseq
    %v627 = vshrl.u32 %v626, 7
    %v628 = vsub.s32 %v625, %v627
    %v629 = vrot.slane %v516, %v628
    %vm630 = vcmask 917312
    %v631 = vsel %vm630, %v629, %v624
    %v632 = vadd.s32 %v536, 4294967184
    %v633 = vlaneseq
    %v634 = vshrl.u32 %v633, 7
    %v635 = vsub.s32 %v632, %v634
    %v636 = vrot.slane %v517, %v635
    %vm637 = vcmask 982912
    %v638 = vsel %vm637, %v636, %v631
    %v639 = vadd.s32 %v536, 4294967176
    %v640 = vlaneseq
    %v641 = vshrl.u32 %v640, 7
    %v642 = vsub.s32 %v639, %v641
    %v643 = vrot.slane %v518, %v642
    %vm644 = vcmask 1048512
    %v645 = vsel %vm644, %v643, %v638
    %647 = vst [vmem:[#allocation3] sm:$0x1] %v645
    // Predicated region
    $region30: #{tpu_custom_call.1} parent=1 // pred_check
      _
    $region31: #{tpu_custom_call.1} parent=1 // pred_check_branch
      %649 = sbr.rel (0) target = $region33
    $region32: #{tpu_custom_call.1} parent=1 // pred_region
      %s651 = ssub.s32 16, 16
      %652 = vsyncadd [#allocation4], %s651
      %s654 = sshll.u32 [#allocation3], 4
      %s655 = int_to_ptr.vmem [resolvable:$true] %s654
      %657 = dma.vmem_to_hbm [thread:$0]  %s655, 16, %s7, [#allocation4]
    $region33: #{tpu_custom_call.1} parent=1 // pred_fallthru
      _
    // Predicated region
    $region34: #{tpu_custom_call.1} parent=1 // pred_check
      _
    $region35: #{tpu_custom_call.1} parent=1 // pred_check_branch
      %659 = sbr.rel (0) target = $region37
    $region36: #{tpu_custom_call.1} parent=1 // pred_region
      %660 = dma.done [#allocation4], 16
    $region37: #{tpu_custom_call.1} parent=1 // pred_fallthru
      _
    %661 = vsyncpa [#allocation4], 1

// kernel: tpu_custom_call.1
$region0: #{tpu_custom_call.1}
  #allocation0 [shape = 'u32[]', space=smem, size = 0x4, offset = 0x4, fixed_abs, tag = 'smem constant byte address 0x4 - core index']
  #allocation1 [shape = 'u32[144,128]{1,0:T(1,128)}', space=vmem, size = 0x12000, scoped, tag = 'internal scratch']
  #allocation2 [shape = 'f32[1,1]{1,0:T(1,128)S(6)}', space=smem, size = 0x200, scoped, tag = 'scoped memory for tpu_custom_call.1']
  %s0 = inlined_call_operand.hbm [shape: f32[8,100], index: 0, kind: input, shape index: {}]
  %s1 = inlined_call_operand.hbm [shape: bf16[100,128], index: 1, kind: input, shape index: {}]
  %s2 = inlined_call_operand.vmem [shape: f32[1,128], index: 2, kind: input, shape index: {}]
  %s3 = inlined_call_operand.hbm [shape: bf16[128,128], index: 3, kind: input, shape index: {}]
  %s4 = inlined_call_operand.vmem [shape: f32[1,128], index: 4, kind: input, shape index: {}]
  %s5 = inlined_call_operand.vmem [shape: f32[1,128], index: 5, kind: input, shape index: {}]
  %s6 = inlined_call_operand.<no memory space> [shape: f32[1,1], index: 6, kind: input, shape index: {}]
  %s7 = inlined_call_operand.vmem [shape: f32[8,1], index: 7, kind: output, shape index: {}]
  %s8 = sld [smem:[#allocation0]]
  $region84: #{tpu_custom_call.1} parent=0
    _
  %s10 = ssub.s32 1, %s8
  %s11 = scalar_select 0, %s10, %s8
  %12 = sst [smem:[#allocation2]] %s6
  $region1: #{tpu_custom_call.1} parent=0
    #allocation3 [shape = 'u8[65536]{0}', space=vmem, size = 0x10000, scoped, tag = 'input window, operand 0, single buffered']
    #allocation4 [shape = 's32[1]{0}', space=sflag, size = 0x4, scoped, tag = 'scoped memory for tpu_custom_call.1']
    #allocation5 [shape = 'u8[26624]{0}', space=vmem, size = 0x6800, scoped, tag = 'input window, operand 1, single buffered']
    #allocation6 [shape = 's32[1]{0}', space=sflag, size = 0x4, scoped, tag = 'scoped memory for tpu_custom_call.1']
    #allocation7 [shape = 'u8[32768]{0}', space=vmem, size = 0x8000, scoped, tag = 'input window, operand 3, single buffered']
    #allocation8 [shape = 'u8[65536]{0}', space=vmem, size = 0x10000, scoped, tag = 'output window, operand 0, single buffered']
    %13 = vsyncpa [#allocation4], 0
    %14 = vsyncpa [#allocation6], 0
    // Predicated region
    $region2: #{tpu_custom_call.1} parent=1 // pred_check
      _
    $region3: #{tpu_custom_call.1} parent=1 // pred_check_branch
      %16 = sbr.rel (0) target = $region5
    $region4: #{tpu_custom_call.1} parent=1 // pred_region
      %s18 = ssub.s32 2048, 128
      %19 = vsyncadd [#allocation4], %s18
      %s20 = sshll.u32 [#allocation3], 4
      %s21 = int_to_ptr.vmem [resolvable:$true] %s20
      %26 = dma.hbm_to_vmem [thread:$0]  %s0, 128, %s21, [#allocation4], 128, 128, 8
    $region5: #{tpu_custom_call.1} parent=1 // pred_fallthru
      _
    // Predicated region
    $region6: #{tpu_custom_call.1} parent=1 // pred_check
      _
    $region7: #{tpu_custom_call.1} parent=1 // pred_check_branch
      %28 = sbr.rel (0) target = $region9
    $region8: #{tpu_custom_call.1} parent=1 // pred_region
      %s30 = ssub.s32 832, 832
      %31 = vsyncadd [#allocation6], %s30
      %s32 = sshll.u32 [#allocation5], 4
      %s33 = int_to_ptr.vmem [resolvable:$true] %s32
      %38 = dma.hbm_to_vmem [thread:$0]  %s1, 832, %s33, [#allocation6], 64, 64, 4
    $region9: #{tpu_custom_call.1} parent=1 // pred_fallthru
      _
    // Predicated region
    $region10: #{tpu_custom_call.1} parent=1 // pred_check
      _
    $region11: #{tpu_custom_call.1} parent=1 // pred_check_branch
      %40 = sbr.rel (0) target = $region13
    $region12: #{tpu_custom_call.1} parent=1 // pred_region
      _
    $region13: #{tpu_custom_call.1} parent=1 // pred_fallthru
      _
    // Predicated region
    $region14: #{tpu_custom_call.1} parent=1 // pred_check
      _
    $region15: #{tpu_custom_call.1} parent=1 // pred_check_branch
      %42 = sbr.rel (0) target = $region17
    $region16: #{tpu_custom_call.1} parent=1 // pred_region
      %s44 = ssub.s32 1024, 1024
      %45 = vsyncadd [#allocation6], %s44
      %s46 = sshll.u32 [#allocation7], 4
      %s47 = int_to_ptr.vmem [resolvable:$true] %s46
      %52 = dma.hbm_to_vmem [thread:$0]  %s3, 1024, %s47, [#allocation6], 64, 64, 4
    $region17: #{tpu_custom_call.1} parent=1 // pred_fallthru
      _
    // Predicated region
    $region18: #{tpu_custom_call.1} parent=1 // pred_check
      _
    $region19: #{tpu_custom_call.1} parent=1 // pred_check_branch
      %54 = sbr.rel (0) target = $region21
    $region20: #{tpu_custom_call.1} parent=1 // pred_region
      _
    $region21: #{tpu_custom_call.1} parent=1 // pred_fallthru
      _
    // Predicated region
    $region22: #{tpu_custom_call.1} parent=1 // pred_check
      _
    $region23: #{tpu_custom_call.1} parent=1 // pred_check_branch
      %56 = sbr.rel (0) target = $region25
    $region24: #{tpu_custom_call.1} parent=1 // pred_region
      _
    $region25: #{tpu_custom_call.1} parent=1 // pred_fallthru
      _
    // Predicated region
    $region26: #{tpu_custom_call.1} parent=1 // pred_check
      _
    $region27: #{tpu_custom_call.1} parent=1 // pred_check_branch
      %58 = sbr.rel (0) target = $region29
    $region28: #{tpu_custom_call.1} parent=1 // pred_region
      _
    $region29: #{tpu_custom_call.1} parent=1 // pred_fallthru
      _
    // Predicated region
    $region30: #{tpu_custom_call.1} parent=1 // pred_check
      _
    $region31: #{tpu_custom_call.1} parent=1 // pred_check_branch
      %60 = sbr.rel (0) target = $region33
    $region32: #{tpu_custom_call.1} parent=1 // pred_region
      %61 = dma.done [#allocation4], 2048
    $region33: #{tpu_custom_call.1} parent=1 // pred_fallthru
      _
    // Predicated region
    $region34: #{tpu_custom_call.1} parent=1 // pred_check
      _
    $region35: #{tpu_custom_call.1} parent=1 // pred_check_branch
      %63 = sbr.rel (0) target = $region37
    $region36: #{tpu_custom_call.1} parent=1 // pred_region
      %64 = dma.done [#allocation6], 832
    $region37: #{tpu_custom_call.1} parent=1 // pred_fallthru
      _
    // Predicated region
    $region38: #{tpu_custom_call.1} parent=1 // pred_check
      _
    $region39: #{tpu_custom_call.1} parent=1 // pred_check_branch
      %66 = sbr.rel (0) target = $region41
    $region40: #{tpu_custom_call.1} parent=1 // pred_region
      %67 = dma.done [#allocation6], 1024
    $region41: #{tpu_custom_call.1} parent=1 // pred_fallthru
      _
    %v69 = vld [vmem:[#allocation3] sm:$0xff]
    %v70 = vld [vmem:[#allocation3 + $0x8] sm:$0xff]
    %v71 = vld [vmem:[#allocation3 + $0x10] sm:$0xff]
    %v72 = vld [vmem:[#allocation3 + $0x18] sm:$0xff]
    %v73 = vld [vmem:[#allocation3 + $0x20] sm:$0xff]
    %v74 = vld [vmem:[#allocation3 + $0x28] sm:$0xff]
    %v75 = vld [vmem:[#allocation3 + $0x30] sm:$0xff]
    %v76 = vld [vmem:[#allocation3 + $0x38] sm:$0xff]
    %v77 = vld [vmem:[#allocation3 + $0x40] sm:$0xff]
    %v78 = vld [vmem:[#allocation3 + $0x48] sm:$0xff]
    %v79 = vld [vmem:[#allocation3 + $0x50] sm:$0xff]
    %v80 = vld [vmem:[#allocation3 + $0x58] sm:$0xff]
    %v81 = vld [vmem:[#allocation3 + $0x60] sm:$0xff]
    %v82 = vld [vmem:[#allocation3 + $0x68] sm:$0xff]
    %v83 = vld [vmem:[#allocation3 + $0x70] sm:$0xff]
    %v84 = vld [vmem:[#allocation3 + $0x78] sm:$0xff]
    %v85 = vpack.c.bf16 %v70, %v69
    %v86 = vpack.c.bf16 %v72, %v71
    %v87 = vpack.c.bf16 %v74, %v73
    %v88 = vpack.c.bf16 %v76, %v75
    %v89 = vpack.c.bf16 %v78, %v77
    %v90 = vpack.c.bf16 %v80, %v79
    %v91 = vpack.c.bf16 %v82, %v81
    %v92 = vpack.c.bf16 %v84, %v83
    %v93 = vld [vmem:[#allocation5] sm:$0xf]
    %v94 = vld [vmem:[#allocation5 + $0x4] sm:$0xf]
    %v95 = vld [vmem:[#allocation5 + $0x8] sm:$0xf]
    %v96 = vld [vmem:[#allocation5 + $0xc] sm:$0xf]
    %v97 = vld [vmem:[#allocation5 + $0x10] sm:$0xf]
    %v98 = vld [vmem:[#allocation5 + $0x14] sm:$0xf]
    %v99 = vld [vmem:[#allocation5 + $0x18] sm:$0xf]
    %v100 = vld [vmem:[#allocation5 + $0x1c] sm:$0xf]
    %v101 = vld [vmem:[#allocation5 + $0x20] sm:$0xf]
    %v102 = vld [vmem:[#allocation5 + $0x24] sm:$0xf]
    %v103 = vld [vmem:[#allocation5 + $0x28] sm:$0xf]
    %v104 = vld [vmem:[#allocation5 + $0x2c] sm:$0xf]
    %v105 = vld [vmem:[#allocation5 + $0x30] sm:$0x3]
    %v106 = vld [vmem:[%s2] sm:$0x1]
    %v108 = vlaneseq
    %v109 = vshrl.u32 %v108, 7
    %v110 = vsub.s32 0, %v109
    %v111 = vrot.slane %v106, %v110
    %v126 = vunpack.c.l.b16 %v93
    %v127 = vunpack.c.l.b16 %v94
    %v128 = vunpack.c.l.b16 %v95
    %v129 = vunpack.c.l.b16 %v96
    %v130 = vunpack.c.l.b16 %v97
    %v131 = vunpack.c.l.b16 %v98
    %v132 = vunpack.c.l.b16 %v99
    %v133 = vunpack.c.l.b16 %v100
    %v134 = vunpack.c.l.b16 %v101
    %v135 = vunpack.c.l.b16 %v102
    %v136 = vunpack.c.l.b16 %v103
    %v137 = vunpack.c.l.b16 %v104
    %v138 = vunpack.c.l.b16 %v105
    %v139 = vpack.c.b16 %v127, %v126
    %v140 = vpack.c.b16 %v129, %v128
    %v141 = vpack.c.b16 %v131, %v130
    %v142 = vpack.c.b16 %v133, %v132
    %v143 = vpack.c.b16 %v135, %v134
    %v144 = vpack.c.b16 %v137, %v136
    %v145 = vpack.c.b16 %v138, %v138
    %vm152 = vcmask 818176
    %v154 = vsel %vm152, %v85, 0
    %v157 = vsel %vm152, %v86, 0
    %v160 = vsel %vm152, %v87, 0
    %v163 = vsel %vm152, %v88, 0
    %v166 = vsel %vm152, %v89, 0
    %v169 = vsel %vm152, %v90, 0
    %v172 = vsel %vm152, %v91, 0
    %v175 = vsel %vm152, %v92, 0
    %vm177 = vcmask 1041408
    %v179 = vsel %vm177, %v145, 0
    %181 = vmatprep.subr.bf16.mxu0 0
    %182 = vmatpush1.bf16.msra.mxu0 %v139
    %183 = vmatprep.subr.bf16.mxu0 0
    %184 = vmatpush1.bf16.msra.mxu0 %v140
    %185 = vmatprep.subr.bf16.mxu0 0
    %186 = vmatpush1.bf16.msra.mxu0 %v141
    %187 = vmatprep.subr.bf16.mxu0 0
    %188 = vmatpush1.bf16.msra.mxu0 %v142
    %189 = vmatprep.subr.bf16.mxu0 0
    %190 = vmatpush1.bf16.msra.mxu0 %v143
    %191 = vmatprep.subr.bf16.mxu0 0
    %192 = vmatpush1.bf16.msra.mxu0 %v144
    %193 = vmatprep.subr.bf16.mxu0 0
    %194 = vmatpush1.bf16.msra.mxu0 %v179
    %195 = vmatprep.subr.bf16.mxu0 0
    %196 = vmatpush1.bf16.msra.mxu0 0
    %197 = vmatprep.subr.bf16.mxu0 0
    %198 = vmatpush1.bf16.msra.mxu0 0
    %199 = vmatprep.subr.bf16.mxu0 0
    %200 = vmatpush1.bf16.msra.mxu0 0
    %201 = vmatprep.subr.bf16.mxu0 0
    %202 = vmatpush1.bf16.msra.mxu0 0
    %203 = vmatprep.subr.bf16.mxu0 0
    %204 = vmatpush1.bf16.msra.mxu0 0
    %205 = vmatprep.subr.bf16.mxu0 0
    %206 = vmatpush1.bf16.msra.mxu0 0
    %207 = vmatprep.subr.bf16.mxu0 0
    %208 = vmatpush1.bf16.msra.mxu0 0
    %209 = vmatprep.subr.bf16.mxu0 0
    %210 = vmatpush1.bf16.msra.mxu0 0
    %211 = vmatprep.subr.bf16.mxu0 0
    %212 = vmatpush1.bf16.msra.mxu0 0
    %213 = vmatprep.mubr.bf16.mxu0 0
    %214 = vmatmul.mubr.bf16.gmra.mrb[0].mxu0 %v154
    %v215 = vpop.f32.mrb[0].mxu0
    %v216 = vadd.f32 %v111, %v215
    %v217 = vpop.f32.mrb[0].mxu0
    %v218 = vpop.f32.mrb[0].mxu0
    %v219 = vadd.f32 %v111, %v218
    %v220 = vpop.f32.mrb[0].mxu0
    %221 = vmatprep.mubr.bf16.mxu0 0
    %222 = vmatmul.mubr.bf16.gmra.mrb[0].mxu0 %v157
    %v223 = vpop.f32.mrb[0].mxu0
    %v224 = vadd.f32 %v111, %v223
    %v225 = vpop.f32.mrb[0].mxu0
    %v226 = vpop.f32.mrb[0].mxu0
    %v227 = vadd.f32 %v111, %v226
    %v228 = vpop.f32.mrb[0].mxu0
    %229 = vmatprep.mubr.bf16.mxu0 0
    %230 = vmatmul.mubr.bf16.gmra.mrb[0].mxu0 %v160
    %v231 = vpop.f32.mrb[0].mxu0
    %v232 = vadd.f32 %v111, %v231
    %v233 = vpop.f32.mrb[0].mxu0
    %v234 = vpop.f32.mrb[0].mxu0
    %v235 = vadd.f32 %v111, %v234
    %v236 = vpop.f32.mrb[0].mxu0
    %237 = vmatprep.mubr.bf16.mxu0 0
    %238 = vmatmul.mubr.bf16.gmra.mrb[0].mxu0 %v163
    %v239 = vpop.f32.mrb[0].mxu0
    %v240 = vadd.f32 %v111, %v239
    %v241 = vpop.f32.mrb[0].mxu0
    %v242 = vpop.f32.mrb[0].mxu0
    %v243 = vadd.f32 %v111, %v242
    %v244 = vpop.f32.mrb[0].mxu0
    %245 = vmatprep.mubr.bf16.mxu0 0
    %246 = vmatmul.mubr.bf16.gmra.mrb[0].mxu0 %v166
    %v247 = vpop.f32.mrb[0].mxu0
    %v248 = vadd.f32 %v111, %v247
    %v249 = vpop.f32.mrb[0].mxu0
    %v250 = vpop.f32.mrb[0].mxu0
    %v251 = vadd.f32 %v111, %v250
    %v252 = vpop.f32.mrb[0].mxu0
    %253 = vmatprep.mubr.bf16.mxu0 0
    %254 = vmatmul.mubr.bf16.gmra.mrb[0].mxu0 %v169
    %v255 = vpop.f32.mrb[0].mxu0
    %v256 = vadd.f32 %v111, %v255
    %v257 = vpop.f32.mrb[0].mxu0
    %v258 = vpop.f32.mrb[0].mxu0
    %v259 = vadd.f32 %v111, %v258
    %v260 = vpop.f32.mrb[0].mxu0
    %261 = vmatprep.mubr.bf16.mxu0 0
    %262 = vmatmul.mubr.bf16.gmra.mrb[0].mxu0 %v172
    %v263 = vpop.f32.mrb[0].mxu0
    %v264 = vadd.f32 %v111, %v263
    %v265 = vpop.f32.mrb[0].mxu0
    %v266 = vpop.f32.mrb[0].mxu0
    %v267 = vadd.f32 %v111, %v266
    %v268 = vpop.f32.mrb[0].mxu0
    %269 = vmatprep.mubr.bf16.mxu0 0
    %270 = vmatmul.mubr.bf16.gmra.mrb[0].mxu0 %v175
    %v271 = vpop.f32.mrb[0].mxu0
    %v272 = vadd.f32 %v111, %v271
    %v273 = vpop.f32.mrb[0].mxu0
    %v274 = vpop.f32.mrb[0].mxu0
    %v275 = vadd.f32 %v111, %v274
    %v276 = vpop.f32.mrb[0].mxu0
    %277 = vdwg.mxu0
    %v278 = vmax.f32 %v216, 0.0
    %v279 = vmax.f32 %v219, 0.0
    %v280 = vmax.f32 %v224, 0.0
    %v281 = vmax.f32 %v227, 0.0
    %v282 = vmax.f32 %v232, 0.0
    %v283 = vmax.f32 %v235, 0.0
    %v284 = vmax.f32 %v240, 0.0
    %v285 = vmax.f32 %v243, 0.0
    %v286 = vmax.f32 %v248, 0.0
    %v287 = vmax.f32 %v251, 0.0
    %v288 = vmax.f32 %v256, 0.0
    %v289 = vmax.f32 %v259, 0.0
    %v290 = vmax.f32 %v264, 0.0
    %v291 = vmax.f32 %v267, 0.0
    %v292 = vmax.f32 %v272, 0.0
    %v293 = vmax.f32 %v275, 0.0
    %v294 = vpack.c.bf16 %v279, %v278
    %v295 = vpack.c.bf16 %v281, %v280
    %v296 = vpack.c.bf16 %v283, %v282
    %v297 = vpack.c.bf16 %v285, %v284
    %v298 = vpack.c.bf16 %v287, %v286
    %v299 = vpack.c.bf16 %v289, %v288
    %v300 = vpack.c.bf16 %v291, %v290
    %v301 = vpack.c.bf16 %v293, %v292
    %v302 = vld [vmem:[#allocation7] sm:$0xf]
    %v303 = vld [vmem:[#allocation7 + $0x4] sm:$0xf]
    %v304 = vld [vmem:[#allocation7 + $0x8] sm:$0xf]
    %v305 = vld [vmem:[#allocation7 + $0xc] sm:$0xf]
    %v306 = vld [vmem:[#allocation7 + $0x10] sm:$0xf]
    %v307 = vld [vmem:[#allocation7 + $0x14] sm:$0xf]
    %v308 = vld [vmem:[#allocation7 + $0x18] sm:$0xf]
    %v309 = vld [vmem:[#allocation7 + $0x1c] sm:$0xf]
    %v310 = vld [vmem:[#allocation7 + $0x20] sm:$0xf]
    %v311 = vld [vmem:[#allocation7 + $0x24] sm:$0xf]
    %v312 = vld [vmem:[#allocation7 + $0x28] sm:$0xf]
    %v313 = vld [vmem:[#allocation7 + $0x2c] sm:$0xf]
    %v314 = vld [vmem:[#allocation7 + $0x30] sm:$0xf]
    %v315 = vld [vmem:[#allocation7 + $0x34] sm:$0xf]
    %v316 = vld [vmem:[#allocation7 + $0x38] sm:$0xf]
    %v317 = vld [vmem:[#allocation7 + $0x3c] sm:$0xf]
    %v318 = vld [vmem:[%s4] sm:$0x1]
    %v320 = vlaneseq
    %v321 = vshrl.u32 %v320, 7
    %v322 = vsub.s32 0, %v321
    %v323 = vrot.slane %v318, %v322
    %v341 = vunpack.c.l.b16 %v302
    %v342 = vunpack.c.l.b16 %v303
    %v343 = vunpack.c.l.b16 %v304
    %v344 = vunpack.c.l.b16 %v305
    %v345 = vunpack.c.l.b16 %v306
    %v346 = vunpack.c.l.b16 %v307
    %v347 = vunpack.c.l.b16 %v308
    %v348 = vunpack.c.l.b16 %v309
    %v349 = vunpack.c.l.b16 %v310
    %v350 = vunpack.c.l.b16 %v311
    %v351 = vunpack.c.l.b16 %v312
    %v352 = vunpack.c.l.b16 %v313
    %v353 = vunpack.c.l.b16 %v314
    %v354 = vunpack.c.l.b16 %v315
    %v355 = vunpack.c.l.b16 %v316
    %v356 = vunpack.c.l.b16 %v317
    %v357 = vpack.c.b16 %v342, %v341
    %v358 = vpack.c.b16 %v344, %v343
    %v359 = vpack.c.b16 %v346, %v345
    %v360 = vpack.c.b16 %v348, %v347
    %v361 = vpack.c.b16 %v350, %v349
    %v362 = vpack.c.b16 %v352, %v351
    %v363 = vpack.c.b16 %v354, %v353
    %v364 = vpack.c.b16 %v356, %v355
    %373 = vmatprep.subr.bf16.mxu0 0
    %374 = vmatpush1.bf16.msra.mxu0 %v357
    %375 = vmatprep.subr.bf16.mxu0 0
    %376 = vmatpush1.bf16.msra.mxu0 %v358
    %377 = vmatprep.subr.bf16.mxu0 0
    %378 = vmatpush1.bf16.msra.mxu0 %v359
    %379 = vmatprep.subr.bf16.mxu0 0
    %380 = vmatpush1.bf16.msra.mxu0 %v360
    %381 = vmatprep.subr.bf16.mxu0 0
    %382 = vmatpush1.bf16.msra.mxu0 %v361
    %383 = vmatprep.subr.bf16.mxu0 0
    %384 = vmatpush1.bf16.msra.mxu0 %v362
    %385 = vmatprep.subr.bf16.mxu0 0
    %386 = vmatpush1.bf16.msra.mxu0 %v363
    %387 = vmatprep.subr.bf16.mxu0 0
    %388 = vmatpush1.bf16.msra.mxu0 %v364
    %389 = vmatprep.subr.bf16.mxu0 0
    %390 = vmatpush1.bf16.msra.mxu0 0
    %391 = vmatprep.subr.bf16.mxu0 0
    %392 = vmatpush1.bf16.msra.mxu0 0
    %393 = vmatprep.subr.bf16.mxu0 0
    %394 = vmatpush1.bf16.msra.mxu0 0
    %395 = vmatprep.subr.bf16.mxu0 0
    %396 = vmatpush1.bf16.msra.mxu0 0
    %397 = vmatprep.subr.bf16.mxu0 0
    %398 = vmatpush1.bf16.msra.mxu0 0
    %399 = vmatprep.subr.bf16.mxu0 0
    %400 = vmatpush1.bf16.msra.mxu0 0
    %401 = vmatprep.subr.bf16.mxu0 0
    %402 = vmatpush1.bf16.msra.mxu0 0
    %403 = vmatprep.subr.bf16.mxu0 0
    %404 = vmatpush1.bf16.msra.mxu0 0
    %405 = vmatprep.mubr.bf16.mxu0 0
    %406 = vmatmul.mubr.bf16.gmra.mrb[0].mxu0 %v294
    %v407 = vpop.f32.mrb[0].mxu0
    %v408 = vadd.f32 %v323, %v407
    %v409 = vpop.f32.mrb[0].mxu0
    %v410 = vpop.f32.mrb[0].mxu0
    %v411 = vadd.f32 %v323, %v410
    %v412 = vpop.f32.mrb[0].mxu0
    %413 = vmatprep.mubr.bf16.mxu0 0
    %414 = vmatmul.mubr.bf16.gmra.mrb[0].mxu0 %v295
    %v415 = vpop.f32.mrb[0].mxu0
    %v416 = vadd.f32 %v323, %v415
    %v417 = vpop.f32.mrb[0].mxu0
    %v418 = vpop.f32.mrb[0].mxu0
    %v419 = vadd.f32 %v323, %v418
    %v420 = vpop.f32.mrb[0].mxu0
    %421 = vmatprep.mubr.bf16.mxu0 0
    %422 = vmatmul.mubr.bf16.gmra.mrb[0].mxu0 %v296
    %v423 = vpop.f32.mrb[0].mxu0
    %v424 = vadd.f32 %v323, %v423
    %v425 = vpop.f32.mrb[0].mxu0
    %v426 = vpop.f32.mrb[0].mxu0
    %v427 = vadd.f32 %v323, %v426
    %v428 = vpop.f32.mrb[0].mxu0
    %429 = vmatprep.mubr.bf16.mxu0 0
    %430 = vmatmul.mubr.bf16.gmra.mrb[0].mxu0 %v297
    %v431 = vpop.f32.mrb[0].mxu0
    %v432 = vadd.f32 %v323, %v431
    %v433 = vpop.f32.mrb[0].mxu0
    %v434 = vpop.f32.mrb[0].mxu0
    %v435 = vadd.f32 %v323, %v434
    %v436 = vpop.f32.mrb[0].mxu0
    %437 = vmatprep.mubr.bf16.mxu0 0
    %438 = vmatmul.mubr.bf16.gmra.mrb[0].mxu0 %v298
    %v439 = vpop.f32.mrb[0].mxu0
    %v440 = vadd.f32 %v323, %v439
    %v441 = vpop.f32.mrb[0].mxu0
    %v442 = vpop.f32.mrb[0].mxu0
    %v443 = vadd.f32 %v323, %v442
    %v444 = vpop.f32.mrb[0].mxu0
    %445 = vmatprep.mubr.bf16.mxu0 0
    %446 = vmatmul.mubr.bf16.gmra.mrb[0].mxu0 %v299
    %v447 = vpop.f32.mrb[0].mxu0
    %v448 = vadd.f32 %v323, %v447
    %v449 = vpop.f32.mrb[0].mxu0
    %v450 = vpop.f32.mrb[0].mxu0
    %v451 = vadd.f32 %v323, %v450
    %v452 = vpop.f32.mrb[0].mxu0
    %453 = vmatprep.mubr.bf16.mxu0 0
    %454 = vmatmul.mubr.bf16.gmra.mrb[0].mxu0 %v300
    %v455 = vpop.f32.mrb[0].mxu0
    %v456 = vadd.f32 %v323, %v455
    %v457 = vpop.f32.mrb[0].mxu0
    %v458 = vpop.f32.mrb[0].mxu0
    %v459 = vadd.f32 %v323, %v458
    %v460 = vpop.f32.mrb[0].mxu0
    %461 = vmatprep.mubr.bf16.mxu0 0
    %462 = vmatmul.mubr.bf16.gmra.mrb[0].mxu0 %v301
    %v463 = vpop.f32.mrb[0].mxu0
    %v464 = vadd.f32 %v323, %v463
    %v465 = vpop.f32.mrb[0].mxu0
    %v466 = vpop.f32.mrb[0].mxu0
    %v467 = vadd.f32 %v323, %v466
    %v468 = vpop.f32.mrb[0].mxu0
    %469 = vdwg.mxu0
    %v470 = vmax.f32 %v408, 0.0
    %v471 = vmax.f32 %v411, 0.0
    %v472 = vmax.f32 %v416, 0.0
    %v473 = vmax.f32 %v419, 0.0
    %v474 = vmax.f32 %v424, 0.0
    %v475 = vmax.f32 %v427, 0.0
    %v476 = vmax.f32 %v432, 0.0
    %v477 = vmax.f32 %v435, 0.0
    %v478 = vmax.f32 %v440, 0.0
    %v479 = vmax.f32 %v443, 0.0
    %v480 = vmax.f32 %v448, 0.0
    %v481 = vmax.f32 %v451, 0.0
    %v482 = vmax.f32 %v456, 0.0
    %v483 = vmax.f32 %v459, 0.0
    %v484 = vmax.f32 %v464, 0.0
    %v485 = vmax.f32 %v467, 0.0
    %v486 = vld [vmem:[%s5] sm:$0x1]
    %v488 = vlaneseq
    %v489 = vshrl.u32 %v488, 7
    %v490 = vsub.s32 0, %v489
    %v491 = vrot.slane %v486, %v490
    %v493 = vmul.f32 %v470, %v491
    %v494 = vmul.f32 %v471, %v491
    %v495 = vmul.f32 %v472, %v491
    %v496 = vmul.f32 %v473, %v491
    %v497 = vmul.f32 %v474, %v491
    %v498 = vmul.f32 %v475, %v491
    %v499 = vmul.f32 %v476, %v491
    %v500 = vmul.f32 %v477, %v491
    %v501 = vmul.f32 %v478, %v491
    %v502 = vmul.f32 %v479, %v491
    %v503 = vmul.f32 %v480, %v491
    %v504 = vmul.f32 %v481, %v491
    %v505 = vmul.f32 %v482, %v491
    %v506 = vmul.f32 %v483, %v491
    %v507 = vmul.f32 %v484, %v491
    %v508 = vmul.f32 %v485, %v491
    %509 = vadd.xlane.f32.xlu0 %v493
    %v510 = vpop.xlane.xlu0 %509
    %511 = vadd.xlane.f32.xlu0 %v494
    %v512 = vpop.xlane.xlu0 %511
    %513 = vadd.xlane.f32.xlu0 %v495
    %v514 = vpop.xlane.xlu0 %513
    %515 = vadd.xlane.f32.xlu0 %v496
    %v516 = vpop.xlane.xlu0 %515
    %517 = vadd.xlane.f32.xlu0 %v497
    %v518 = vpop.xlane.xlu0 %517
    %519 = vadd.xlane.f32.xlu0 %v498
    %v520 = vpop.xlane.xlu0 %519
    %521 = vadd.xlane.f32.xlu0 %v499
    %v522 = vpop.xlane.xlu0 %521
    %523 = vadd.xlane.f32.xlu0 %v500
    %v524 = vpop.xlane.xlu0 %523
    %525 = vadd.xlane.f32.xlu0 %v501
    %v526 = vpop.xlane.xlu0 %525
    %527 = vadd.xlane.f32.xlu0 %v502
    %v528 = vpop.xlane.xlu0 %527
    %529 = vadd.xlane.f32.xlu0 %v503
    %v530 = vpop.xlane.xlu0 %529
    %531 = vadd.xlane.f32.xlu0 %v504
    %v532 = vpop.xlane.xlu0 %531
    %533 = vadd.xlane.f32.xlu0 %v505
    %v534 = vpop.xlane.xlu0 %533
    %535 = vadd.xlane.f32.xlu0 %v506
    %v536 = vpop.xlane.xlu0 %535
    %537 = vadd.xlane.f32.xlu0 %v507
    %v538 = vpop.xlane.xlu0 %537
    %539 = vadd.xlane.f32.xlu0 %v508
    %v540 = vpop.xlane.xlu0 %539
    %s541 = sld [smem:[#allocation2]]
    %v542 = vstv %s541
    %v543 = vadd.f32 %v510, %v542
    %v544 = vadd.f32 %v512, %v542
    %v545 = vadd.f32 %v514, %v542
    %v546 = vadd.f32 %v516, %v542
    %v547 = vadd.f32 %v518, %v542
    %v548 = vadd.f32 %v520, %v542
    %v549 = vadd.f32 %v522, %v542
    %v550 = vadd.f32 %v524, %v542
    %v551 = vadd.f32 %v526, %v542
    %v552 = vadd.f32 %v528, %v542
    %v553 = vadd.f32 %v530, %v542
    %v554 = vadd.f32 %v532, %v542
    %v555 = vadd.f32 %v534, %v542
    %v556 = vadd.f32 %v536, %v542
    %v557 = vadd.f32 %v538, %v542
    %v558 = vadd.f32 %v540, %v542
    %vm559 = vcmask 7168
    %560 = vst.msk [vmem:[#allocation8] sm:$0xff] %vm559, %v543
    %561 = vst.msk [vmem:[#allocation8 + $0x8] sm:$0xff] %vm559, %v544
    %562 = vst.msk [vmem:[#allocation8 + $0x10] sm:$0xff] %vm559, %v545
    %563 = vst.msk [vmem:[#allocation8 + $0x18] sm:$0xff] %vm559, %v546
    %564 = vst.msk [vmem:[#allocation8 + $0x20] sm:$0xff] %vm559, %v547
    %565 = vst.msk [vmem:[#allocation8 + $0x28] sm:$0xff] %vm559, %v548
    %566 = vst.msk [vmem:[#allocation8 + $0x30] sm:$0xff] %vm559, %v549
    %567 = vst.msk [vmem:[#allocation8 + $0x38] sm:$0xff] %vm559, %v550
    %568 = vst.msk [vmem:[#allocation8 + $0x40] sm:$0xff] %vm559, %v551
    %569 = vst.msk [vmem:[#allocation8 + $0x48] sm:$0xff] %vm559, %v552
    %570 = vst.msk [vmem:[#allocation8 + $0x50] sm:$0xff] %vm559, %v553
    %571 = vst.msk [vmem:[#allocation8 + $0x58] sm:$0xff] %vm559, %v554
    %572 = vst.msk [vmem:[#allocation8 + $0x60] sm:$0xff] %vm559, %v555
    %573 = vst.msk [vmem:[#allocation8 + $0x68] sm:$0xff] %vm559, %v556
    %574 = vst.msk [vmem:[#allocation8 + $0x70] sm:$0xff] %vm559, %v557
    %575 = vst.msk [vmem:[#allocation8 + $0x78] sm:$0xff] %vm559, %v558
    // Predicated region
    $region42: #{tpu_custom_call.1} parent=1 // pred_check
      _
    $region43: #{tpu_custom_call.1} parent=1 // pred_check_branch
      %577 = sbr.rel (0) target = $region45
    $region44: #{tpu_custom_call.1} parent=1 // pred_region
      // Predicated region
      $region46: #{tpu_custom_call.1} parent=44 // pred_check
        _
      $region47: #{tpu_custom_call.1} parent=44 // pred_check_branch
        %579 = sbr.rel (0) target = $region49
      $region48: #{tpu_custom_call.1} parent=44 // pred_region
        // Predicated region
        $region50: #{tpu_custom_call.1} parent=48 // pred_check
          _
        $region51: #{tpu_custom_call.1} parent=48 // pred_check_branch
          %581 = sbr.rel (0) target = $region53
        $region52: #{tpu_custom_call.1} parent=48 // pred_region
          // Predicated region
          $region65: #{tpu_custom_call.1} parent=52 // pred_check
            _
          $region66: #{tpu_custom_call.1} parent=52 // pred_check_branch
            %596 = sbr.rel (0) target = $region68
          $region67: #{tpu_custom_call.1} parent=52 // pred_region
            loop: start=0, step=1, limit=1
            $region69: #{tpu_custom_call.1} parent=67 // loop_pre_header
              _
            $region70: #{tpu_custom_call.1} parent=67 // loop_header
              %s598 = sphi 0, %s602
              %p599 = scmp.ge.s32.totalorder %s598, 1
              %s603 = sphi [#allocation8], [#allocation8]
              %s604 = sphi %s7, %s7
            $region71: #{tpu_custom_call.1} parent=67 // loop_header_branch
              %601 = sbr.rel (%p599) target = $region75
            $region72: #{tpu_custom_call.1} parent=67 // loop_body
              %v605 = vld [vmem:[%s603] sm:$0xff]
              %606 = vst [vmem:[%s604] sm:$0xff] %v605
            $region73: #{tpu_custom_call.1} parent=67 // loop_footer
              %s602 = sadd.s32 1, %s598
            $region74: #{tpu_custom_call.1} parent=67 // loop_footer_branch
              %597 = sbr.rel target = $region70
            $region75: #{tpu_custom_call.1} parent=67 // loop_exit
              _
          $region68: #{tpu_custom_call.1} parent=52 // pred_fallthru
            _
          // Predicated region
          $region76: #{tpu_custom_call.1} parent=52 // pred_check
            _
          $region77: #{tpu_custom_call.1} parent=52 // pred_check_branch
            %608 = sbr.rel target = $region79
          $region78: #{tpu_custom_call.1} parent=52 // pred_region
            _
          $region79: #{tpu_custom_call.1} parent=52 // pred_fallthru
            _
        $region53: #{tpu_custom_call.1} parent=48 // pred_fallthru
          _
        // Predicated region
        $region54: #{tpu_custom_call.1} parent=48 // pred_check
          _
        $region55: #{tpu_custom_call.1} parent=48 // pred_check_branch
          %583 = sbr.rel target = $region57
        $region56: #{tpu_custom_call.1} parent=48 // pred_region
          loop: start=0, step=1, limit=1
          $region58: #{tpu_custom_call.1} parent=56 // loop_pre_header
            _
          $region59: #{tpu_custom_call.1} parent=56 // loop_header
            %s586 = sphi 0, %s590
            %p587 = scmp.ge.s32.totalorder %s586, 1
            %s591 = sphi [#allocation8], [#allocation8]
            %s592 = sphi %s7, %s7
          $region60: #{tpu_custom_call.1} parent=56 // loop_header_branch
            %589 = sbr.rel (%p587) target = $region64
          $region61: #{tpu_custom_call.1} parent=56 // loop_body
            %v593 = vld [vmem:[%s591] sm:$0xff]
            %594 = vst [vmem:[%s592] sm:$0xff] %v593
          $region62: #{tpu_custom_call.1} parent=56 // loop_footer
            %s590 = sadd.s32 1, %s586
          $region63: #{tpu_custom_call.1} parent=56 // loop_footer_branch
            %585 = sbr.rel target = $region59
          $region64: #{tpu_custom_call.1} parent=56 // loop_exit
            _
        $region57: #{tpu_custom_call.1} parent=48 // pred_fallthru
          _
      $region49: #{tpu_custom_call.1} parent=44 // pred_fallthru
        _
      %609 = vnop
    $region45: #{tpu_custom_call.1} parent=1 // pred_fallthru
      _
    // Predicated region
    $region80: #{tpu_custom_call.1} parent=1 // pred_check
      _
    $region81: #{tpu_custom_call.1} parent=1 // pred_check_branch
      %611 = sbr.rel (0) target = $region83
    $region82: #{tpu_custom_call.1} parent=1 // pred_region
      _
    $region83: #{tpu_custom_call.1} parent=1 // pred_fallthru
      _
    %612 = vsyncpa [#allocation4], 1
    %613 = vsyncpa [#allocation6], 1

</llo_original>
